<compile_context>
chip_gen: v5e
topology: v5e:2x2
jax: 0.10.0
libtpu: 0.0.40
codegen_flags: <defaults>
</compile_context>

<pallas_src>
import functools

import jax
import jax.numpy as jnp
from jax.experimental import pallas as pl
from jax.experimental.pallas import tpu as pltpu

EPS = 1e-5  # nn.InstanceNorm2d default eps


def _class_in_kernel(x_ref, m_ref, c_ref, w_ref, g_ref, b_ref, o_ref,
                     *, classes, H, W, K):
    """One batch element per grid step; everything lane-dense on (.., H*W).

    x_ref:  (1, C, HW)            input features
    m_ref:  (1, M, HW)            raw mask logits (softmax over M done here)
    c_ref:  (2, HW) int32         [col; row] of every flattened position
    w_ref:  (n*K, K*3*n)          block conv weight, rows (dy, class),
                                  cols (dx, in_channel, class)
    g_ref:  (C, 1)                InstanceNorm affine weight
    b_ref:  (C, 1)                InstanceNorm affine bias
    o_ref:  (1, C, HW)            output
    """
    HW = H * W
    pad = K // 2
    n_cls = len(classes)
    f32 = jnp.float32
    HIGH = jax.lax.Precision.HIGHEST

    x = x_ref[0].astype(f32)                      # (C, HW)
    logits = m_ref[0].astype(f32)                 # (M, HW)
    coords = c_ref[...]                           # (2, HW) int32
    wb = w_ref[...]                               # (n*K, K*3*n)
    gamma = g_ref[...]                            # (C, 1)
    beta = b_ref[...]                             # (C, 1)

    colv = coords[0:1, :]                         # (1, HW)
    rowv = coords[1:2, :]                         # (1, HW)

    # ---- channel statistics of x, shared by every class (mask >= 0) --------
    xmean = jnp.mean(x, axis=0, keepdims=True)    # (1, HW)
    xmax = jnp.max(x, axis=0, keepdims=True)      # (1, HW)
    xsq = x * x                                   # (C, HW)

    # ---- softmax over the mask-class dim (exact reciprocal) ----------------
    mmax = jnp.max(logits, axis=0, keepdims=True)
    e = jnp.exp(logits - mmax)
    inv_den = 1.0 / jnp.sum(e, axis=0, keepdims=True)
    sel = jnp.concatenate([e[ci:ci + 1] for ci in classes], axis=0)   # (n, HW)
    masks = sel * inv_den                                             # (n, HW)

    # ---- conv input planes for all classes, channel-major: [avg|max|mask] --
    planes = jnp.concatenate([masks * xmean, masks * xmax, masks], axis=0)  # (3n, HW)

    # ---- 7x7 conv stage 1: K column shifts (roll along lanes) + border mask
    cols = []
    for j in range(K):
        d = j - pad
        if d == 0:
            sh = planes
        else:
            sh = pltpu.roll(planes, shift=(-d) % HW, axis=1)
            ok = ((colv + d) >= 0) & ((colv + d) < W)
            sh = jnp.where(ok, sh, 0.0)
        cols.append(sh)
    sx = jnp.concatenate(cols, axis=0)            # (K*3n, HW)

    # ---- stage 2: (dx, channel) contraction for every (dy, class) on MXU ---
    inner = jnp.dot(wb, sx, preferred_element_type=f32, precision=HIGH)  # (n*K, HW)

    # ---- stage 3: row shifts + border masks, one (n_cls, HW) block per dy --
    conv = None
    for i in range(K):
        d = i - pad
        blk = inner[i * n_cls:(i + 1) * n_cls]    # (n, HW), classes at this dy
        if d != 0:
            blk = pltpu.roll(blk, shift=(-d * W) % HW, axis=1)
            ok = ((rowv + d) >= 0) & ((rowv + d) < H)
            blk = jnp.where(ok, blk, 0.0)
        conv = blk if conv is None else conv + blk

    atten = jax.nn.sigmoid(conv)                  # (n, HW), EUP
    matt = masks * atten                          # per-class spatial gain
    mattsq = matt * matt

    # ---- InstanceNorm stats for every class via MXU (out_n = x * matt_n) ---
    dims = (((1,), (1,)), ((), ()))               # contract over HW (q @ k^T form)
    inv_hw = 1.0 / HW
    mu = jax.lax.dot_general(x, matt, dims,
                             preferred_element_type=f32, precision=HIGH) * inv_hw     # (C, n)
    musq = jax.lax.dot_general(xsq, mattsq, dims,
                               preferred_element_type=f32, precision=HIGH) * inv_hw   # (C, n)
    var = jnp.maximum(musq - mu * mu, 0.0)        # one-pass (biased) variance
    scale = gamma * jax.lax.rsqrt(var + EPS)      # (C, n) folded affine scale
    shift = beta - mu * scale                     # (C, n) folded affine shift
    shift_sum = jnp.sum(shift, axis=1, keepdims=True)   # (C, 1)

    # ---- sum_n IN(out_n) = x * (scale @ matt) + sum_n shift, then ReLU -----
    gain = jnp.dot(scale, matt, preferred_element_type=f32, precision=HIGH)  # (C, HW)
    o_ref[0] = jnp.maximum(x * gain + shift_sum, 0.0).astype(o_ref.dtype)


def class_in_block_forward(x, masks, conv_w, gamma, beta, classin_classes):
    """x: (N, C, H, W); masks: (N, M, H, W); conv_w: (1, 3, K, K) (branches[0]);
    gamma/beta: (C,). Returns (N, C, H, W) float32."""
    N, C, H, W = x.shape
    M = masks.shape[1]
    K = conv_w.shape[-1]
    HW = H * W
    n_cls = len(classin_classes)

    # TODO(synk): if production H*W is not a multiple of 128, pad HW in the
    # wrapper (zero the pad lanes in the softmax masks and keep true HW in the
    # mean divisors); the test shapes used here are already lane-aligned.
    # Lane-dense views: pure metadata reshape in HBM, native dtype.
    x2 = x.reshape(N, C, HW)
    m2 = masks.reshape(N, M, HW)

    # Block conv weight: rows (dy, class) [dy-major], cols (dx, channel, class)
    # so the column-shift stage can stack all classes' planes channel-major and
    # the row-shift stage processes all classes of one dy in a single block.
    wt = jnp.transpose(conv_w[0].astype(jnp.float32), (1, 2, 0))   # (K, K, 3) [dy, dx, c]
    eye = jnp.eye(n_cls, dtype=jnp.float32)
    w_blk = jnp.einsum("ydc,nm->yndcm", wt, eye).reshape(n_cls * K, K * 3 * n_cls)

    # (col, row) of each flattened position, for in-kernel conv border masks.
    pos = jnp.arange(HW, dtype=jnp.int32)
    coords = jnp.stack([pos % W, pos // W], axis=0)                # (2, HW) int32

    g = gamma.reshape(C, 1).astype(jnp.float32)
    b = beta.reshape(C, 1).astype(jnp.float32)

    classes = tuple(int(c) for c in classin_classes)
    kernel = functools.partial(_class_in_kernel, classes=classes, H=H, W=W, K=K)

    flops = int(N * (2 * (n_cls * K) * (3 * n_cls * K) * HW        # conv block dot
                     + 3 * 2 * C * n_cls * HW                      # mu / musq / gain dots
                     + 12 * C * HW + 30 * n_cls * HW))             # elementwise slabs
    transcendentals = int(N * (M * HW + n_cls * HW + C * n_cls))
    bytes_accessed = int(x2.size * x2.dtype.itemsize
                         + m2.size * m2.dtype.itemsize
                         + N * C * HW * 4
                         + (w_blk.size + coords.size + 2 * C) * 4)

    out = pl.pallas_call(
        kernel,
        out_shape=jax.ShapeDtypeStruct((N, C, HW), jnp.float32),
        grid=(N,),
        in_specs=[
            pl.BlockSpec((1, C, HW), lambda n: (n, 0, 0)),                 # x
            pl.BlockSpec((1, M, HW), lambda n: (n, 0, 0)),                 # mask logits
            pl.BlockSpec((2, HW), lambda n: (0, 0)),                       # col/row coords
            pl.BlockSpec((n_cls * K, K * 3 * n_cls), lambda n: (0, 0)),    # block conv weight
            pl.BlockSpec((C, 1), lambda n: (0, 0)),                        # IN gamma
            pl.BlockSpec((C, 1), lambda n: (0, 0)),                        # IN beta
        ],
        out_specs=pl.BlockSpec((1, C, HW), lambda n: (n, 0, 0)),
        compiler_params=pltpu.CompilerParams(
            dimension_semantics=("parallel",),      # batch across TCs on v7x
            vmem_limit_bytes=64 * 1024 * 1024,      # headroom for realistic HW
        ),
        cost_estimate=pl.CostEstimate(flops=flops,
                                      transcendentals=transcendentals,
                                      bytes_accessed=bytes_accessed),
    )(x2, m2, coords, w_blk, g, b)

    return out.reshape(N, C, H, W)


def reference_forward(x, masks, conv_w, gamma, beta, classin_classes):
    """Pure-JAX reference matching the PyTorch forward (uses branches[0] always)."""
    sm = jax.nn.softmax(masks, axis=1)
    outs = 0.0
    for i in classin_classes:
        mask = sm[:, i:i + 1]                                    # (N,1,H,W)
        mid = x * mask
        avg = jnp.mean(mid, axis=1, keepdims=True)
        mx = jnp.max(mid, axis=1, keepdims=True)
        atten_in = jnp.concatenate([avg, mx, mask], axis=1)      # (N,3,H,W)
        conv = jax.lax.conv_general_dilated(
            atten_in, conv_w, window_strides=(1, 1),
            padding=((3, 3), (3, 3)),
            dimension_numbers=("NCHW", "OIHW", "NCHW"),
            precision=jax.lax.Precision.HIGHEST)                 # exact f32 conv
        atten = jax.nn.sigmoid(conv)
        out = mid * atten
        mu = jnp.mean(out, axis=(2, 3), keepdims=True)
        var = jnp.mean((out - mu) ** 2, axis=(2, 3), keepdims=True)
        normed = ((out - mu) / jnp.sqrt(var + EPS)
                  * gamma.reshape(1, -1, 1, 1) + beta.reshape(1, -1, 1, 1))
        outs = outs + normed
    return jnp.maximum(outs, 0.0)


if __name__ == "__main__":
    key = jax.random.PRNGKey(0)
    N, C, H, W = 2, 4, 16, 16          # inplanes = C = 4
    M = 6                              # total classes in `masks`
    classin_classes = (1, 3, 5)

    k1, k2, k3 = jax.random.split(key, 3)
    x = jax.random.normal(k1, (N, C, H, W), jnp.float32)
    masks = jax.random.normal(k2, (N, M, H, W), jnp.float32)

    # Deterministic param init. One conv branch per class exists in the module,
    # but the forward only ever applies branches[0] (idx is never incremented).
    branch_ws = jax.random.normal(k3, (len(classin_classes), 1, 3, 7, 7),
                                  jnp.float32) * 0.1
    conv_w = branch_ws[0]                          # (1, 3, 7, 7), bias=False
    gamma = jnp.ones((C,), jnp.float32)            # InstanceNorm2d affine init
    beta = jnp.zeros((C,), jnp.float32)

    out = class_in_block_forward(x, masks, conv_w, gamma, beta, classin_classes)
    out = jax.block_until_ready(out)

    ref = reference_forward(x, masks, conv_w, gamma, beta, classin_classes)
    assert out.shape == (N, C, H, W)
    if not bool(jnp.allclose(out, ref, rtol=2e-3, atol=2e-3)):
        raise AssertionError(
            f"kernel/reference mismatch, max abs err = {jnp.max(jnp.abs(out - ref))}")

    print("KERNEL_OK")
</pallas_src>

<mosaic_0001>
module attributes {stable_mosaic.version = 11 : i64} {
  func.func @_class_in_kernel(%arg0: i32, %arg1: memref<1x4x256xf32, #tpu.memory_space<vmem>>, %arg2: memref<1x6x256xf32, #tpu.memory_space<vmem>>, %arg3: memref<2x256xi32, #tpu.memory_space<vmem>>, %arg4: memref<21x63xf32, #tpu.memory_space<vmem>>, %arg5: memref<4x1xf32, #tpu.memory_space<vmem>>, %arg6: memref<4x1xf32, #tpu.memory_space<vmem>>, %arg7: memref<1x4x256xf32, #tpu.memory_space<vmem>>) attributes {dimension_semantics = [#tpu.dimension_semantics<parallel>], iteration_bounds = array<i64: 2>, scalar_prefetch = 0 : i64, scratch_operands = 0 : i64, tpu.core_type = #tpu.core_type<tc>, window_params = [{transform_indices = @transform_0, window_bounds = array<i64: 1, 4, 256>}, {transform_indices = @transform_1, window_bounds = array<i64: 1, 6, 256>}, {pipeline_mode = #tpu.pipeline_mode<synchronous>, transform_indices = @transform_2, window_bounds = array<i64: 2, 256>}, {pipeline_mode = #tpu.pipeline_mode<synchronous>, transform_indices = @transform_3, window_bounds = array<i64: 21, 63>}, {pipeline_mode = #tpu.pipeline_mode<synchronous>, transform_indices = @transform_4, window_bounds = array<i64: 4, 1>}, {pipeline_mode = #tpu.pipeline_mode<synchronous>, transform_indices = @transform_5, window_bounds = array<i64: 4, 1>}, {transform_indices = @transform_6, window_bounds = array<i64: 1, 4, 256>}]} {
    %c0 = arith.constant 0 : index
    %c0_0 = arith.constant 0 : index
    %c0_1 = arith.constant 0 : index
    %0 = vector.load %arg1[%c0, %c0_0, %c0_1] : memref<1x4x256xf32, #tpu.memory_space<vmem>>, vector<1x4x256xf32>
    %1 = vector.shape_cast %0 : vector<1x4x256xf32> to vector<4x256xf32>
    %c0_2 = arith.constant 0 : index
    %c0_3 = arith.constant 0 : index
    %c0_4 = arith.constant 0 : index
    %2 = vector.load %arg2[%c0_2, %c0_3, %c0_4] : memref<1x6x256xf32, #tpu.memory_space<vmem>>, vector<1x6x256xf32>
    %3 = vector.shape_cast %2 : vector<1x6x256xf32> to vector<6x256xf32>
    %c0_5 = arith.constant 0 : index
    %c0_6 = arith.constant 0 : index
    %4 = vector.load %arg3[%c0_5, %c0_6] : memref<2x256xi32, #tpu.memory_space<vmem>>, vector<2x256xi32>
    %c0_7 = arith.constant 0 : index
    %c0_8 = arith.constant 0 : index
    %5 = vector.load %arg4[%c0_7, %c0_8] : memref<21x63xf32, #tpu.memory_space<vmem>>, vector<21x63xf32>
    %c0_9 = arith.constant 0 : index
    %c0_10 = arith.constant 0 : index
    %6 = vector.load %arg5[%c0_9, %c0_10] : memref<4x1xf32, #tpu.memory_space<vmem>>, vector<4x1xf32>
    %c0_11 = arith.constant 0 : index
    %c0_12 = arith.constant 0 : index
    %7 = vector.load %arg6[%c0_11, %c0_12] : memref<4x1xf32, #tpu.memory_space<vmem>>, vector<4x1xf32>
    %8 = vector.extract_strided_slice %4 {offsets = [0, 0], sizes = [1, 256], strides = [1, 1]} : vector<2x256xi32> to vector<1x256xi32>
    %9 = vector.extract_strided_slice %4 {offsets = [1, 0], sizes = [1, 256], strides = [1, 1]} : vector<2x256xi32> to vector<1x256xi32>
    %cst = arith.constant dense<0.000000e+00> : vector<256xf32>
    %10 = vector.multi_reduction <add>, %1, %cst [0] : vector<4x256xf32> to vector<256xf32>
    %11 = vector.shape_cast %10 : vector<256xf32> to vector<1x256xf32>
    %cst_13 = arith.constant 4.000000e+00 : f32
    %12 = vector.broadcast %cst_13 : f32 to vector<1x256xf32>
    %13 = arith.divf %11, %12 : vector<1x256xf32>
    %cst_14 = arith.constant dense<0xFF800000> : vector<256xf32>
    %14 = vector.multi_reduction <maximumf>, %1, %cst_14 [0] : vector<4x256xf32> to vector<256xf32>
    %15 = vector.shape_cast %14 : vector<256xf32> to vector<1x256xf32>
    %16 = arith.mulf %1, %1 : vector<4x256xf32>
    %cst_15 = arith.constant dense<0xFF800000> : vector<256xf32>
    %17 = vector.multi_reduction <maximumf>, %3, %cst_15 [0] : vector<6x256xf32> to vector<256xf32>
    %18 = vector.shape_cast %17 : vector<256xf32> to vector<1x256xf32>
    %19 = vector.broadcast %18 : vector<1x256xf32> to vector<6x256xf32>
    %20 = arith.subf %3, %19 : vector<6x256xf32>
    %21 = math.exp %20 : vector<6x256xf32>
    %cst_16 = arith.constant dense<0.000000e+00> : vector<256xf32>
    %22 = vector.multi_reduction <add>, %21, %cst_16 [0] : vector<6x256xf32> to vector<256xf32>
    %23 = vector.shape_cast %22 : vector<256xf32> to vector<1x256xf32>
    %cst_17 = arith.constant 1.000000e+00 : f32
    %24 = vector.broadcast %cst_17 : f32 to vector<1x256xf32>
    %25 = arith.divf %24, %23 : vector<1x256xf32>
    %26 = vector.extract_strided_slice %21 {offsets = [1, 0], sizes = [1, 256], strides = [1, 1]} : vector<6x256xf32> to vector<1x256xf32>
    %27 = vector.extract_strided_slice %21 {offsets = [3, 0], sizes = [1, 256], strides = [1, 1]} : vector<6x256xf32> to vector<1x256xf32>
    %28 = vector.extract_strided_slice %21 {offsets = [5, 0], sizes = [1, 256], strides = [1, 1]} : vector<6x256xf32> to vector<1x256xf32>
    %29 = tpu.concatenate %26, %27, %28 in 0 : vector<1x256xf32>, vector<1x256xf32>, vector<1x256xf32> -> vector<3x256xf32>
    %30 = vector.broadcast %25 : vector<1x256xf32> to vector<3x256xf32>
    %31 = arith.mulf %29, %30 : vector<3x256xf32>
    %32 = vector.broadcast %13 : vector<1x256xf32> to vector<3x256xf32>
    %33 = arith.mulf %31, %32 : vector<3x256xf32>
    %34 = vector.broadcast %15 : vector<1x256xf32> to vector<3x256xf32>
    %35 = arith.mulf %31, %34 : vector<3x256xf32>
    %36 = tpu.concatenate %33, %35, %31 in 0 : vector<3x256xf32>, vector<3x256xf32>, vector<3x256xf32> -> vector<9x256xf32>
    %c3_i32 = arith.constant 3 : i32
    %37 = tpu.dynamic_rotate %36 by %c3_i32 dim 1 : vector<9x256xf32>, i32 -> vector<9x256xf32>
    %c-3_i32 = arith.constant -3 : i32
    %38 = vector.broadcast %c-3_i32 : i32 to vector<1x256xi32>
    %39 = arith.addi %8, %38 : vector<1x256xi32>
    %c0_i32 = arith.constant 0 : i32
    %40 = vector.broadcast %c0_i32 : i32 to vector<1x256xi32>
    %41 = arith.cmpi sge, %39, %40 : vector<1x256xi32>
    %c-3_i32_18 = arith.constant -3 : i32
    %42 = vector.broadcast %c-3_i32_18 : i32 to vector<1x256xi32>
    %43 = arith.addi %8, %42 : vector<1x256xi32>
    %c16_i32 = arith.constant 16 : i32
    %44 = vector.broadcast %c16_i32 : i32 to vector<1x256xi32>
    %45 = arith.cmpi slt, %43, %44 : vector<1x256xi32>
    %46 = arith.andi %41, %45 : vector<1x256xi1>
    %cst_19 = arith.constant 0.000000e+00 : f32
    %47 = vector.shape_cast %46 : vector<1x256xi1> to vector<1x256xi1>
    %48 = vector.broadcast %47 : vector<1x256xi1> to vector<9x256xi1>
    %49 = vector.broadcast %cst_19 : f32 to vector<9x256xf32>
    %50 = arith.select %48, %37, %49 : vector<9x256xi1>, vector<9x256xf32>
    %c2_i32 = arith.constant 2 : i32
    %51 = tpu.dynamic_rotate %36 by %c2_i32 dim 1 : vector<9x256xf32>, i32 -> vector<9x256xf32>
    %c-2_i32 = arith.constant -2 : i32
    %52 = vector.broadcast %c-2_i32 : i32 to vector<1x256xi32>
    %53 = arith.addi %8, %52 : vector<1x256xi32>
    %c0_i32_20 = arith.constant 0 : i32
    %54 = vector.broadcast %c0_i32_20 : i32 to vector<1x256xi32>
    %55 = arith.cmpi sge, %53, %54 : vector<1x256xi32>
    %c-2_i32_21 = arith.constant -2 : i32
    %56 = vector.broadcast %c-2_i32_21 : i32 to vector<1x256xi32>
    %57 = arith.addi %8, %56 : vector<1x256xi32>
    %c16_i32_22 = arith.constant 16 : i32
    %58 = vector.broadcast %c16_i32_22 : i32 to vector<1x256xi32>
    %59 = arith.cmpi slt, %57, %58 : vector<1x256xi32>
    %60 = arith.andi %55, %59 : vector<1x256xi1>
    %cst_23 = arith.constant 0.000000e+00 : f32
    %61 = vector.shape_cast %60 : vector<1x256xi1> to vector<1x256xi1>
    %62 = vector.broadcast %61 : vector<1x256xi1> to vector<9x256xi1>
    %63 = vector.broadcast %cst_23 : f32 to vector<9x256xf32>
    %64 = arith.select %62, %51, %63 : vector<9x256xi1>, vector<9x256xf32>
    %c1_i32 = arith.constant 1 : i32
    %65 = tpu.dynamic_rotate %36 by %c1_i32 dim 1 : vector<9x256xf32>, i32 -> vector<9x256xf32>
    %c-1_i32 = arith.constant -1 : i32
    %66 = vector.broadcast %c-1_i32 : i32 to vector<1x256xi32>
    %67 = arith.addi %8, %66 : vector<1x256xi32>
    %c0_i32_24 = arith.constant 0 : i32
    %68 = vector.broadcast %c0_i32_24 : i32 to vector<1x256xi32>
    %69 = arith.cmpi sge, %67, %68 : vector<1x256xi32>
    %c-1_i32_25 = arith.constant -1 : i32
    %70 = vector.broadcast %c-1_i32_25 : i32 to vector<1x256xi32>
    %71 = arith.addi %8, %70 : vector<1x256xi32>
    %c16_i32_26 = arith.constant 16 : i32
    %72 = vector.broadcast %c16_i32_26 : i32 to vector<1x256xi32>
    %73 = arith.cmpi slt, %71, %72 : vector<1x256xi32>
    %74 = arith.andi %69, %73 : vector<1x256xi1>
    %cst_27 = arith.constant 0.000000e+00 : f32
    %75 = vector.shape_cast %74 : vector<1x256xi1> to vector<1x256xi1>
    %76 = vector.broadcast %75 : vector<1x256xi1> to vector<9x256xi1>
    %77 = vector.broadcast %cst_27 : f32 to vector<9x256xf32>
    %78 = arith.select %76, %65, %77 : vector<9x256xi1>, vector<9x256xf32>
    %c255_i32 = arith.constant 255 : i32
    %79 = tpu.dynamic_rotate %36 by %c255_i32 dim 1 : vector<9x256xf32>, i32 -> vector<9x256xf32>
    %c1_i32_28 = arith.constant 1 : i32
    %80 = vector.broadcast %c1_i32_28 : i32 to vector<1x256xi32>
    %81 = arith.addi %8, %80 : vector<1x256xi32>
    %c0_i32_29 = arith.constant 0 : i32
    %82 = vector.broadcast %c0_i32_29 : i32 to vector<1x256xi32>
    %83 = arith.cmpi sge, %81, %82 : vector<1x256xi32>
    %c1_i32_30 = arith.constant 1 : i32
    %84 = vector.broadcast %c1_i32_30 : i32 to vector<1x256xi32>
    %85 = arith.addi %8, %84 : vector<1x256xi32>
    %c16_i32_31 = arith.constant 16 : i32
    %86 = vector.broadcast %c16_i32_31 : i32 to vector<1x256xi32>
    %87 = arith.cmpi slt, %85, %86 : vector<1x256xi32>
    %88 = arith.andi %83, %87 : vector<1x256xi1>
    %cst_32 = arith.constant 0.000000e+00 : f32
    %89 = vector.shape_cast %88 : vector<1x256xi1> to vector<1x256xi1>
    %90 = vector.broadcast %89 : vector<1x256xi1> to vector<9x256xi1>
    %91 = vector.broadcast %cst_32 : f32 to vector<9x256xf32>
    %92 = arith.select %90, %79, %91 : vector<9x256xi1>, vector<9x256xf32>
    %c254_i32 = arith.constant 254 : i32
    %93 = tpu.dynamic_rotate %36 by %c254_i32 dim 1 : vector<9x256xf32>, i32 -> vector<9x256xf32>
    %c2_i32_33 = arith.constant 2 : i32
    %94 = vector.broadcast %c2_i32_33 : i32 to vector<1x256xi32>
    %95 = arith.addi %8, %94 : vector<1x256xi32>
    %c0_i32_34 = arith.constant 0 : i32
    %96 = vector.broadcast %c0_i32_34 : i32 to vector<1x256xi32>
    %97 = arith.cmpi sge, %95, %96 : vector<1x256xi32>
    %c2_i32_35 = arith.constant 2 : i32
    %98 = vector.broadcast %c2_i32_35 : i32 to vector<1x256xi32>
    %99 = arith.addi %8, %98 : vector<1x256xi32>
    %c16_i32_36 = arith.constant 16 : i32
    %100 = vector.broadcast %c16_i32_36 : i32 to vector<1x256xi32>
    %101 = arith.cmpi slt, %99, %100 : vector<1x256xi32>
    %102 = arith.andi %97, %101 : vector<1x256xi1>
    %cst_37 = arith.constant 0.000000e+00 : f32
    %103 = vector.shape_cast %102 : vector<1x256xi1> to vector<1x256xi1>
    %104 = vector.broadcast %103 : vector<1x256xi1> to vector<9x256xi1>
    %105 = vector.broadcast %cst_37 : f32 to vector<9x256xf32>
    %106 = arith.select %104, %93, %105 : vector<9x256xi1>, vector<9x256xf32>
    %c253_i32 = arith.constant 253 : i32
    %107 = tpu.dynamic_rotate %36 by %c253_i32 dim 1 : vector<9x256xf32>, i32 -> vector<9x256xf32>
    %c3_i32_38 = arith.constant 3 : i32
    %108 = vector.broadcast %c3_i32_38 : i32 to vector<1x256xi32>
    %109 = arith.addi %8, %108 : vector<1x256xi32>
    %c0_i32_39 = arith.constant 0 : i32
    %110 = vector.broadcast %c0_i32_39 : i32 to vector<1x256xi32>
    %111 = arith.cmpi sge, %109, %110 : vector<1x256xi32>
    %c3_i32_40 = arith.constant 3 : i32
    %112 = vector.broadcast %c3_i32_40 : i32 to vector<1x256xi32>
    %113 = arith.addi %8, %112 : vector<1x256xi32>
    %c16_i32_41 = arith.constant 16 : i32
    %114 = vector.broadcast %c16_i32_41 : i32 to vector<1x256xi32>
    %115 = arith.cmpi slt, %113, %114 : vector<1x256xi32>
    %116 = arith.andi %111, %115 : vector<1x256xi1>
    %cst_42 = arith.constant 0.000000e+00 : f32
    %117 = vector.shape_cast %116 : vector<1x256xi1> to vector<1x256xi1>
    %118 = vector.broadcast %117 : vector<1x256xi1> to vector<9x256xi1>
    %119 = vector.broadcast %cst_42 : f32 to vector<9x256xf32>
    %120 = arith.select %118, %107, %119 : vector<9x256xi1>, vector<9x256xf32>
    %121 = tpu.concatenate %50, %64, %78, %36, %92, %106, %120 in 0 : vector<9x256xf32>, vector<9x256xf32>, vector<9x256xf32>, vector<9x256xf32>, vector<9x256xf32>, vector<9x256xf32>, vector<9x256xf32> -> vector<63x256xf32>
    %cst_43 = arith.constant dense<0.000000e+00> : vector<21x256xf32>
    %122 = tpu.matmul %5, %121, %cst_43 {dimension_numbers = #tpu.dot_dimension_numbers<[1], [0], [0], [1], [0, 0, 1, 1], [], []>, precision = #tpu.contract_precision<fp32>} : vector<21x63xf32>, vector<63x256xf32>, vector<21x256xf32> -> vector<21x256xf32>
    %123 = vector.extract_strided_slice %122 {offsets = [0, 0], sizes = [3, 256], strides = [1, 1]} : vector<21x256xf32> to vector<3x256xf32>
    %c48_i32 = arith.constant 48 : i32
    %124 = tpu.dynamic_rotate %123 by %c48_i32 dim 1 : vector<3x256xf32>, i32 -> vector<3x256xf32>
    %c-3_i32_44 = arith.constant -3 : i32
    %125 = vector.broadcast %c-3_i32_44 : i32 to vector<1x256xi32>
    %126 = arith.addi %9, %125 : vector<1x256xi32>
    %c0_i32_45 = arith.constant 0 : i32
    %127 = vector.broadcast %c0_i32_45 : i32 to vector<1x256xi32>
    %128 = arith.cmpi sge, %126, %127 : vector<1x256xi32>
    %c-3_i32_46 = arith.constant -3 : i32
    %129 = vector.broadcast %c-3_i32_46 : i32 to vector<1x256xi32>
    %130 = arith.addi %9, %129 : vector<1x256xi32>
    %c16_i32_47 = arith.constant 16 : i32
    %131 = vector.broadcast %c16_i32_47 : i32 to vector<1x256xi32>
    %132 = arith.cmpi slt, %130, %131 : vector<1x256xi32>
    %133 = arith.andi %128, %132 : vector<1x256xi1>
    %cst_48 = arith.constant 0.000000e+00 : f32
    %134 = vector.shape_cast %133 : vector<1x256xi1> to vector<1x256xi1>
    %135 = vector.broadcast %134 : vector<1x256xi1> to vector<3x256xi1>
    %136 = vector.broadcast %cst_48 : f32 to vector<3x256xf32>
    %137 = arith.select %135, %124, %136 : vector<3x256xi1>, vector<3x256xf32>
    %138 = vector.extract_strided_slice %122 {offsets = [3, 0], sizes = [3, 256], strides = [1, 1]} : vector<21x256xf32> to vector<3x256xf32>
    %c32_i32 = arith.constant 32 : i32
    %139 = tpu.dynamic_rotate %138 by %c32_i32 dim 1 : vector<3x256xf32>, i32 -> vector<3x256xf32>
    %c-2_i32_49 = arith.constant -2 : i32
    %140 = vector.broadcast %c-2_i32_49 : i32 to vector<1x256xi32>
    %141 = arith.addi %9, %140 : vector<1x256xi32>
    %c0_i32_50 = arith.constant 0 : i32
    %142 = vector.broadcast %c0_i32_50 : i32 to vector<1x256xi32>
    %143 = arith.cmpi sge, %141, %142 : vector<1x256xi32>
    %c-2_i32_51 = arith.constant -2 : i32
    %144 = vector.broadcast %c-2_i32_51 : i32 to vector<1x256xi32>
    %145 = arith.addi %9, %144 : vector<1x256xi32>
    %c16_i32_52 = arith.constant 16 : i32
    %146 = vector.broadcast %c16_i32_52 : i32 to vector<1x256xi32>
    %147 = arith.cmpi slt, %145, %146 : vector<1x256xi32>
    %148 = arith.andi %143, %147 : vector<1x256xi1>
    %cst_53 = arith.constant 0.000000e+00 : f32
    %149 = vector.shape_cast %148 : vector<1x256xi1> to vector<1x256xi1>
    %150 = vector.broadcast %149 : vector<1x256xi1> to vector<3x256xi1>
    %151 = vector.broadcast %cst_53 : f32 to vector<3x256xf32>
    %152 = arith.select %150, %139, %151 : vector<3x256xi1>, vector<3x256xf32>
    %153 = arith.addf %137, %152 : vector<3x256xf32>
    %154 = vector.extract_strided_slice %122 {offsets = [6, 0], sizes = [3, 256], strides = [1, 1]} : vector<21x256xf32> to vector<3x256xf32>
    %c16_i32_54 = arith.constant 16 : i32
    %155 = tpu.dynamic_rotate %154 by %c16_i32_54 dim 1 : vector<3x256xf32>, i32 -> vector<3x256xf32>
    %c-1_i32_55 = arith.constant -1 : i32
    %156 = vector.broadcast %c-1_i32_55 : i32 to vector<1x256xi32>
    %157 = arith.addi %9, %156 : vector<1x256xi32>
    %c0_i32_56 = arith.constant 0 : i32
    %158 = vector.broadcast %c0_i32_56 : i32 to vector<1x256xi32>
    %159 = arith.cmpi sge, %157, %158 : vector<1x256xi32>
    %c-1_i32_57 = arith.constant -1 : i32
    %160 = vector.broadcast %c-1_i32_57 : i32 to vector<1x256xi32>
    %161 = arith.addi %9, %160 : vector<1x256xi32>
    %c16_i32_58 = arith.constant 16 : i32
    %162 = vector.broadcast %c16_i32_58 : i32 to vector<1x256xi32>
    %163 = arith.cmpi slt, %161, %162 : vector<1x256xi32>
    %164 = arith.andi %159, %163 : vector<1x256xi1>
    %cst_59 = arith.constant 0.000000e+00 : f32
    %165 = vector.shape_cast %164 : vector<1x256xi1> to vector<1x256xi1>
    %166 = vector.broadcast %165 : vector<1x256xi1> to vector<3x256xi1>
    %167 = vector.broadcast %cst_59 : f32 to vector<3x256xf32>
    %168 = arith.select %166, %155, %167 : vector<3x256xi1>, vector<3x256xf32>
    %169 = arith.addf %153, %168 : vector<3x256xf32>
    %170 = vector.extract_strided_slice %122 {offsets = [9, 0], sizes = [3, 256], strides = [1, 1]} : vector<21x256xf32> to vector<3x256xf32>
    %171 = arith.addf %169, %170 : vector<3x256xf32>
    %172 = vector.extract_strided_slice %122 {offsets = [12, 0], sizes = [3, 256], strides = [1, 1]} : vector<21x256xf32> to vector<3x256xf32>
    %c240_i32 = arith.constant 240 : i32
    %173 = tpu.dynamic_rotate %172 by %c240_i32 dim 1 : vector<3x256xf32>, i32 -> vector<3x256xf32>
    %c1_i32_60 = arith.constant 1 : i32
    %174 = vector.broadcast %c1_i32_60 : i32 to vector<1x256xi32>
    %175 = arith.addi %9, %174 : vector<1x256xi32>
    %c0_i32_61 = arith.constant 0 : i32
    %176 = vector.broadcast %c0_i32_61 : i32 to vector<1x256xi32>
    %177 = arith.cmpi sge, %175, %176 : vector<1x256xi32>
    %c1_i32_62 = arith.constant 1 : i32
    %178 = vector.broadcast %c1_i32_62 : i32 to vector<1x256xi32>
    %179 = arith.addi %9, %178 : vector<1x256xi32>
    %c16_i32_63 = arith.constant 16 : i32
    %180 = vector.broadcast %c16_i32_63 : i32 to vector<1x256xi32>
    %181 = arith.cmpi slt, %179, %180 : vector<1x256xi32>
    %182 = arith.andi %177, %181 : vector<1x256xi1>
    %cst_64 = arith.constant 0.000000e+00 : f32
    %183 = vector.shape_cast %182 : vector<1x256xi1> to vector<1x256xi1>
    %184 = vector.broadcast %183 : vector<1x256xi1> to vector<3x256xi1>
    %185 = vector.broadcast %cst_64 : f32 to vector<3x256xf32>
    %186 = arith.select %184, %173, %185 : vector<3x256xi1>, vector<3x256xf32>
    %187 = arith.addf %171, %186 : vector<3x256xf32>
    %188 = vector.extract_strided_slice %122 {offsets = [15, 0], sizes = [3, 256], strides = [1, 1]} : vector<21x256xf32> to vector<3x256xf32>
    %c224_i32 = arith.constant 224 : i32
    %189 = tpu.dynamic_rotate %188 by %c224_i32 dim 1 : vector<3x256xf32>, i32 -> vector<3x256xf32>
    %c2_i32_65 = arith.constant 2 : i32
    %190 = vector.broadcast %c2_i32_65 : i32 to vector<1x256xi32>
    %191 = arith.addi %9, %190 : vector<1x256xi32>
    %c0_i32_66 = arith.constant 0 : i32
    %192 = vector.broadcast %c0_i32_66 : i32 to vector<1x256xi32>
    %193 = arith.cmpi sge, %191, %192 : vector<1x256xi32>
    %c2_i32_67 = arith.constant 2 : i32
    %194 = vector.broadcast %c2_i32_67 : i32 to vector<1x256xi32>
    %195 = arith.addi %9, %194 : vector<1x256xi32>
    %c16_i32_68 = arith.constant 16 : i32
    %196 = vector.broadcast %c16_i32_68 : i32 to vector<1x256xi32>
    %197 = arith.cmpi slt, %195, %196 : vector<1x256xi32>
    %198 = arith.andi %193, %197 : vector<1x256xi1>
    %cst_69 = arith.constant 0.000000e+00 : f32
    %199 = vector.shape_cast %198 : vector<1x256xi1> to vector<1x256xi1>
    %200 = vector.broadcast %199 : vector<1x256xi1> to vector<3x256xi1>
    %201 = vector.broadcast %cst_69 : f32 to vector<3x256xf32>
    %202 = arith.select %200, %189, %201 : vector<3x256xi1>, vector<3x256xf32>
    %203 = arith.addf %187, %202 : vector<3x256xf32>
    %204 = vector.extract_strided_slice %122 {offsets = [18, 0], sizes = [3, 256], strides = [1, 1]} : vector<21x256xf32> to vector<3x256xf32>
    %c208_i32 = arith.constant 208 : i32
    %205 = tpu.dynamic_rotate %204 by %c208_i32 dim 1 : vector<3x256xf32>, i32 -> vector<3x256xf32>
    %c3_i32_70 = arith.constant 3 : i32
    %206 = vector.broadcast %c3_i32_70 : i32 to vector<1x256xi32>
    %207 = arith.addi %9, %206 : vector<1x256xi32>
    %c0_i32_71 = arith.constant 0 : i32
    %208 = vector.broadcast %c0_i32_71 : i32 to vector<1x256xi32>
    %209 = arith.cmpi sge, %207, %208 : vector<1x256xi32>
    %c3_i32_72 = arith.constant 3 : i32
    %210 = vector.broadcast %c3_i32_72 : i32 to vector<1x256xi32>
    %211 = arith.addi %9, %210 : vector<1x256xi32>
    %c16_i32_73 = arith.constant 16 : i32
    %212 = vector.broadcast %c16_i32_73 : i32 to vector<1x256xi32>
    %213 = arith.cmpi slt, %211, %212 : vector<1x256xi32>
    %214 = arith.andi %209, %213 : vector<1x256xi1>
    %cst_74 = arith.constant 0.000000e+00 : f32
    %215 = vector.shape_cast %214 : vector<1x256xi1> to vector<1x256xi1>
    %216 = vector.broadcast %215 : vector<1x256xi1> to vector<3x256xi1>
    %217 = vector.broadcast %cst_74 : f32 to vector<3x256xf32>
    %218 = arith.select %216, %205, %217 : vector<3x256xi1>, vector<3x256xf32>
    %219 = arith.addf %203, %218 : vector<3x256xf32>
    %220 = arith.negf %219 : vector<3x256xf32>
    %221 = math.exp %220 : vector<3x256xf32>
    %cst_75 = arith.constant 1.000000e+00 : f32
    %222 = vector.broadcast %cst_75 : f32 to vector<3x256xf32>
    %223 = arith.addf %222, %221 : vector<3x256xf32>
    %224 = arith.divf %222, %223 : vector<3x256xf32>
    %225 = arith.mulf %31, %224 : vector<3x256xf32>
    %226 = arith.mulf %225, %225 : vector<3x256xf32>
    %cst_76 = arith.constant dense<0.000000e+00> : vector<4x3xf32>
    %227 = tpu.matmul %1, %225, %cst_76 {dimension_numbers = #tpu.dot_dimension_numbers<[1], [1], [0], [0], [0, 0, 1, 0], [], []>, precision = #tpu.contract_precision<fp32>} : vector<4x256xf32>, vector<3x256xf32>, vector<4x3xf32> -> vector<4x3xf32>
    %cst_77 = arith.constant 3.906250e-03 : f32
    %228 = vector.broadcast %cst_77 : f32 to vector<4x3xf32>
    %229 = arith.mulf %227, %228 : vector<4x3xf32>
    %cst_78 = arith.constant dense<0.000000e+00> : vector<4x3xf32>
    %230 = tpu.matmul %16, %226, %cst_78 {dimension_numbers = #tpu.dot_dimension_numbers<[1], [1], [0], [0], [0, 0, 1, 0], [], []>, precision = #tpu.contract_precision<fp32>} : vector<4x256xf32>, vector<3x256xf32>, vector<4x3xf32> -> vector<4x3xf32>
    %cst_79 = arith.constant 3.906250e-03 : f32
    %231 = vector.broadcast %cst_79 : f32 to vector<4x3xf32>
    %232 = arith.mulf %230, %231 : vector<4x3xf32>
    %233 = arith.mulf %229, %229 : vector<4x3xf32>
    %234 = arith.subf %232, %233 : vector<4x3xf32>
    %cst_80 = arith.constant 0.000000e+00 : f32
    %235 = vector.broadcast %cst_80 : f32 to vector<4x3xf32>
    %236 = arith.maximumf %234, %235 : vector<4x3xf32>
    %cst_81 = arith.constant 9.99999974E-6 : f32
    %237 = vector.broadcast %cst_81 : f32 to vector<4x3xf32>
    %238 = arith.addf %236, %237 : vector<4x3xf32>
    %239 = math.rsqrt %238 : vector<4x3xf32>
    %240 = vector.broadcast %6 : vector<4x1xf32> to vector<4x3xf32>
    %241 = arith.mulf %240, %239 : vector<4x3xf32>
    %242 = arith.mulf %229, %241 : vector<4x3xf32>
    %243 = vector.broadcast %7 : vector<4x1xf32> to vector<4x3xf32>
    %244 = arith.subf %243, %242 : vector<4x3xf32>
    %cst_82 = arith.constant dense<0.000000e+00> : vector<4xf32>
    %245 = vector.multi_reduction <add>, %244, %cst_82 [1] : vector<4x3xf32> to vector<4xf32>
    %246 = vector.shape_cast %245 : vector<4xf32> to vector<4x1xf32>
    %cst_83 = arith.constant dense<0.000000e+00> : vector<4x256xf32>
    %247 = tpu.matmul %241, %225, %cst_83 {dimension_numbers = #tpu.dot_dimension_numbers<[1], [0], [0], [1], [0, 0, 1, 1], [], []>, precision = #tpu.contract_precision<fp32>} : vector<4x3xf32>, vector<3x256xf32>, vector<4x256xf32> -> vector<4x256xf32>
    %248 = arith.mulf %1, %247 : vector<4x256xf32>
    %249 = vector.broadcast %246 : vector<4x1xf32> to vector<4x256xf32>
    %250 = arith.addf %248, %249 : vector<4x256xf32>
    %cst_84 = arith.constant 0.000000e+00 : f32
    %251 = vector.broadcast %cst_84 : f32 to vector<4x256xf32>
    %252 = arith.maximumf %250, %251 : vector<4x256xf32>
    %c0_85 = arith.constant 0 : index
    %c0_86 = arith.constant 0 : index
    %c0_87 = arith.constant 0 : index
    %253 = vector.load %arg7[%c0_85, %c0_86, %c0_87] : memref<1x4x256xf32, #tpu.memory_space<vmem>>, vector<1x4x256xf32>
    %254 = vector.shape_cast %253 : vector<1x4x256xf32> to vector<4x256xf32>
    %255 = vector.shape_cast %252 : vector<4x256xf32> to vector<1x4x256xf32>
    tpu.vector_store %arg7[%c0_85, %c0_86, %c0_87], %255 {strides = array<i32>} : memref<1x4x256xf32, #tpu.memory_space<vmem>>, vector<1x4x256xf32>,
    return
  }
  func.func @transform_0(%arg0: i32) -> (i32, i32, i32) {
    %c0_i32 = arith.constant 0 : i32
    %c0_i32_0 = arith.constant 0 : i32
    %c0_i32_1 = arith.constant 0 : i32
    return %arg0, %c0_i32, %c0_i32_0 : i32, i32, i32
  }
  func.func @transform_1(%arg0: i32) -> (i32, i32, i32) {
    %c0_i32 = arith.constant 0 : i32
    %c0_i32_0 = arith.constant 0 : i32
    %c0_i32_1 = arith.constant 0 : i32
    return %arg0, %c0_i32, %c0_i32_0 : i32, i32, i32
  }
  func.func @transform_2(%arg0: i32) -> (i32, i32) {
    %c0_i32 = arith.constant 0 : i32
    %c0_i32_0 = arith.constant 0 : i32
    %c0_i32_1 = arith.constant 0 : i32
    return %c0_i32, %c0_i32_0 : i32, i32
  }
  func.func @transform_3(%arg0: i32) -> (i32, i32) {
    %c0_i32 = arith.constant 0 : i32
    %c0_i32_0 = arith.constant 0 : i32
    %c0_i32_1 = arith.constant 0 : i32
    return %c0_i32, %c0_i32_0 : i32, i32
  }
  func.func @transform_4(%arg0: i32) -> (i32, i32) {
    %c0_i32 = arith.constant 0 : i32
    %c0_i32_0 = arith.constant 0 : i32
    %c0_i32_1 = arith.constant 0 : i32
    return %c0_i32, %c0_i32_0 : i32, i32
  }
  func.func @transform_5(%arg0: i32) -> (i32, i32) {
    %c0_i32 = arith.constant 0 : i32
    %c0_i32_0 = arith.constant 0 : i32
    %c0_i32_1 = arith.constant 0 : i32
    return %c0_i32, %c0_i32_0 : i32, i32
  }
  func.func @transform_6(%arg0: i32) -> (i32, i32, i32) {
    %c0_i32 = arith.constant 0 : i32
    %c0_i32_0 = arith.constant 0 : i32
    %c0_i32_1 = arith.constant 0 : i32
    return %arg0, %c0_i32, %c0_i32_0 : i32, i32, i32
  }
}

</mosaic_0001>

<llo_original>
// kernel: tpu_custom_call.1
$region0: #{tpu_custom_call.1}
  #allocation0 [shape = 'u32[]', space=smem, size = 0x4, offset = 0x4, fixed_abs, tag = 'smem constant byte address 0x4 - core index']
  #allocation1 [shape = 'u32[72,128]{1,0:T(1,128)}', space=vmem, size = 0x9000, scoped, tag = 'internal scratch']
  %s0 = inlined_call_operand.vmem [shape: f32[2,4,256], index: 0, kind: input, shape index: {}]
  %s1 = inlined_call_operand.vmem [shape: f32[2,6,256], index: 1, kind: input, shape index: {}]
  %s2 = inlined_call_operand.vmem [shape: s32[2,256], index: 2, kind: input, shape index: {}]
  %s3 = inlined_call_operand.vmem [shape: f32[21,63], index: 3, kind: input, shape index: {}]
  %s4 = inlined_call_operand.vmem [shape: f32[4,1], index: 4, kind: input, shape index: {}]
  %s5 = inlined_call_operand.vmem [shape: f32[4,1], index: 5, kind: input, shape index: {}]
  %s6 = inlined_call_operand.hbm [shape: f32[2,4,256], index: 6, kind: output, shape index: {}]
  %s7 = sld [smem:[#allocation0]]
  $region57: #{tpu_custom_call.1} parent=0
    _
  %s9 = ssub.s32 1, %s7
  %s10 = scalar_select 0, %s9, %s7
  $region1: #{tpu_custom_call.1} parent=0
    #allocation2 [shape = 'u8[8192]{0}', space=vmem, size = 0x2000, scoped, tag = 'output window, operand 0']
    #allocation3 [shape = 's32[2]{0}', space=sflag, size = 0x8, scoped, tag = 'scoped memory for tpu_custom_call.1']
    %11 = vsyncpa [#allocation3], 0
    %s12 = scalar_lea.sflag [#allocation3], 1
    %13 = vsyncpa %s12, 0
    loop: start=0, step=1, limit=4
    $region2: #{tpu_custom_call.1} parent=1 // loop_pre_header
      _
    $region3: #{tpu_custom_call.1} parent=1 // loop_header
      %s15 = sphi 0, %s19
      %p16 = scmp.ge.s32.totalorder %s15, 4
      %s25 = sphi 0, %s27
      %s28 = sphi 0, %s25
      %s29 = sphi 0, %s28
      %s45 = sphi 0, %s29
      %s51 = sphi 0, %s53
      %s54 = sphi 0, %s51
      %s55 = sphi 0, %s54
      %s71 = sphi 0, %s55
      %s75 = sphi 0, %s75
      %s77 = sphi 0, %s75
      %s78 = sphi 0, %s77
      %s92 = sphi 0, %s78
      %s96 = sphi 0, %s96
      %s98 = sphi 0, %s96
      %s99 = sphi 0, %s98
      %s113 = sphi 0, %s99
      %s117 = sphi 0, %s117
      %s119 = sphi 0, %s117
      %s120 = sphi 0, %s119
      %s134 = sphi 0, %s120
      %s138 = sphi 0, %s138
      %s140 = sphi 0, %s138
      %s141 = sphi 0, %s140
      %s155 = sphi 0, %s141
      %s161 = sphi 0, %s163
      %s164 = sphi 0, %s161
      %s165 = sphi 0, %s164
      %s181 = sphi 0, %s165
    $region4: #{tpu_custom_call.1} parent=1 // loop_header_branch
      %18 = sbr.rel (%p16) target = $region8
    $region5: #{tpu_custom_call.1} parent=1 // loop_body
      %s20 = ssub.s32 %s15, 1
      %s21 = ssub.s32 %s15, 2
      %s22 = sadd.s32 %s15, 1
      %s23 = ssub.s32 %s15, %s22
      %p24 = scmp.eq.s32.totalorder %s23, 0
      %s26 = sadd.s32 %s25, 1
      %s27 = scalar_select %p24, %s25, %s26
      %p30 = pneg %p24
      %p31 = scmp.eq.s32.totalorder %s15, 1
      %p32 = por %p30, %p31
      %p33 = scmp.ne.s32.totalorder %s25, %s28
      %p34 = scmp.eq.s32.totalorder %s15, 0
      %p35 = por %p33, %p34
      %p36 = scmp.ne.s32.totalorder %s25, %s28
      %p37 = scmp.eq.s32.totalorder %s20, 1
      %p38 = por %p36, %p37
      %p39 = scmp.ne.s32.totalorder %s28, %s29
      %p40 = scmp.eq.s32.totalorder %s20, 0
      %p41 = por %p39, %p40
      %p42 = scmp.ne.s32.totalorder %s28, %s29
      %p43 = scmp.eq.s32.totalorder %s21, 1
      %p44 = por %p42, %p43
      %p46 = scmp.ne.s32.totalorder %s29, %s45
      %p47 = scmp.eq.s32.totalorder %s21, 0
      %p48 = por %p46, %p47
      %s49 = ssub.s32 %s15, %s22
      %p50 = scmp.eq.s32.totalorder %s49, 0
      %s52 = sadd.s32 %s51, 1
      %s53 = scalar_select %p50, %s51, %s52
      %p56 = pneg %p50
      %p57 = scmp.eq.s32.totalorder %s15, 1
      %p58 = por %p56, %p57
      %p59 = scmp.ne.s32.totalorder %s51, %s54
      %p60 = scmp.eq.s32.totalorder %s15, 0
      %p61 = por %p59, %p60
      %p62 = scmp.ne.s32.totalorder %s51, %s54
      %p63 = scmp.eq.s32.totalorder %s20, 1
      %p64 = por %p62, %p63
      %p65 = scmp.ne.s32.totalorder %s54, %s55
      %p66 = scmp.eq.s32.totalorder %s20, 0
      %p67 = por %p65, %p66
      %p68 = scmp.ne.s32.totalorder %s54, %s55
      %p69 = scmp.eq.s32.totalorder %s21, 1
      %p70 = por %p68, %p69
      %p72 = scmp.ne.s32.totalorder %s55, %s71
      %p73 = scmp.eq.s32.totalorder %s21, 0
      %p74 = por %p72, %p73
      %s76 = sadd.s32 %s75, 1
      %p79 = scmp.eq.s32.totalorder %s15, 1
      %p80 = scmp.ne.s32.totalorder %s75, %s77
      %p81 = scmp.eq.s32.totalorder %s15, 0
      %p82 = por %p80, %p81
      %p83 = scmp.ne.s32.totalorder %s75, %s77
      %p84 = scmp.eq.s32.totalorder %s20, 1
      %p85 = por %p83, %p84
      %p86 = scmp.ne.s32.totalorder %s77, %s78
      %p87 = scmp.eq.s32.totalorder %s20, 0
      %p88 = por %p86, %p87
      %p89 = scmp.ne.s32.totalorder %s77, %s78
      %p90 = scmp.eq.s32.totalorder %s21, 1
      %p91 = por %p89, %p90
      %p93 = scmp.ne.s32.totalorder %s78, %s92
      %p94 = scmp.eq.s32.totalorder %s21, 0
      %p95 = por %p93, %p94
      %s97 = sadd.s32 %s96, 1
      %p100 = scmp.eq.s32.totalorder %s15, 1
      %p101 = scmp.ne.s32.totalorder %s96, %s98
      %p102 = scmp.eq.s32.totalorder %s15, 0
      %p103 = por %p101, %p102
      %p104 = scmp.ne.s32.totalorder %s96, %s98
      %p105 = scmp.eq.s32.totalorder %s20, 1
      %p106 = por %p104, %p105
      %p107 = scmp.ne.s32.totalorder %s98, %s99
      %p108 = scmp.eq.s32.totalorder %s20, 0
      %p109 = por %p107, %p108
      %p110 = scmp.ne.s32.totalorder %s98, %s99
      %p111 = scmp.eq.s32.totalorder %s21, 1
      %p112 = por %p110, %p111
      %p114 = scmp.ne.s32.totalorder %s99, %s113
      %p115 = scmp.eq.s32.totalorder %s21, 0
      %p116 = por %p114, %p115
      %s118 = sadd.s32 %s117, 1
      %p121 = scmp.eq.s32.totalorder %s15, 1
      %p122 = scmp.ne.s32.totalorder %s117, %s119
      %p123 = scmp.eq.s32.totalorder %s15, 0
      %p124 = por %p122, %p123
      %p125 = scmp.ne.s32.totalorder %s117, %s119
      %p126 = scmp.eq.s32.totalorder %s20, 1
      %p127 = por %p125, %p126
      %p128 = scmp.ne.s32.totalorder %s119, %s120
      %p129 = scmp.eq.s32.totalorder %s20, 0
      %p130 = por %p128, %p129
      %p131 = scmp.ne.s32.totalorder %s119, %s120
      %p132 = scmp.eq.s32.totalorder %s21, 1
      %p133 = por %p131, %p132
      %p135 = scmp.ne.s32.totalorder %s120, %s134
      %p136 = scmp.eq.s32.totalorder %s21, 0
      %p137 = por %p135, %p136
      %s139 = sadd.s32 %s138, 1
      %p142 = scmp.eq.s32.totalorder %s15, 1
      %p143 = scmp.ne.s32.totalorder %s138, %s140
      %p144 = scmp.eq.s32.totalorder %s15, 0
      %p145 = por %p143, %p144
      %p146 = scmp.ne.s32.totalorder %s138, %s140
      %p147 = scmp.eq.s32.totalorder %s20, 1
      %p148 = por %p146, %p147
      %p149 = scmp.ne.s32.totalorder %s140, %s141
      %p150 = scmp.eq.s32.totalorder %s20, 0
      %p151 = por %p149, %p150
      %p152 = scmp.ne.s32.totalorder %s140, %s141
      %p153 = scmp.eq.s32.totalorder %s21, 1
      %p154 = por %p152, %p153
      %p156 = scmp.ne.s32.totalorder %s141, %s155
      %p157 = scmp.eq.s32.totalorder %s21, 0
      %p158 = por %p156, %p157
      %s159 = ssub.s32 %s15, %s22
      %p160 = scmp.eq.s32.totalorder %s159, 0
      %s162 = sadd.s32 %s161, 1
      %s163 = scalar_select %p160, %s161, %s162
      %p166 = pneg %p160
      %p167 = scmp.eq.s32.totalorder %s15, 1
      %p168 = por %p166, %p167
      %p169 = scmp.ne.s32.totalorder %s161, %s164
      %p170 = scmp.eq.s32.totalorder %s15, 0
      %p171 = por %p169, %p170
      %p172 = scmp.ne.s32.totalorder %s161, %s164
      %p173 = scmp.eq.s32.totalorder %s20, 1
      %p174 = por %p172, %p173
      %p175 = scmp.ne.s32.totalorder %s164, %s165
      %p176 = scmp.eq.s32.totalorder %s20, 0
      %p177 = por %p175, %p176
      %p178 = scmp.ne.s32.totalorder %s164, %s165
      %p179 = scmp.eq.s32.totalorder %s21, 1
      %p180 = por %p178, %p179
      %p182 = scmp.ne.s32.totalorder %s165, %s181
      %p183 = scmp.eq.s32.totalorder %s21, 0
      %p184 = por %p182, %p183
      %p185 = scmp.le.s32.totalorder 1, %s15
      %p186 = scmp.lt.s32.totalorder %s15, 3
      %p187 = pnand %p185, %p186
      %p188 = pneg %p187
      // Predicated region
      $region9: #{tpu_custom_call.1} parent=5 // pred_check
        _
      $region10: #{tpu_custom_call.1} parent=5 // pred_check_branch
        %190 = sbr.rel (%p187) target = $region12
      $region11: #{tpu_custom_call.1} parent=5 // pred_region
        %s191 = ssub.s32 %s15, 1
        // Predicated region
        $region13: #{tpu_custom_call.1} parent=11 // pred_check
          %p192 = pneg %p88
        $region14: #{tpu_custom_call.1} parent=11 // pred_check_branch
          %194 = sbr.rel (%p192) target = $region16
        $region15: #{tpu_custom_call.1} parent=11 // pred_region
          _
        $region16: #{tpu_custom_call.1} parent=11 // pred_fallthru
          _
        // Predicated region
        $region17: #{tpu_custom_call.1} parent=11 // pred_check
          %p195 = pneg %p109
        $region18: #{tpu_custom_call.1} parent=11 // pred_check_branch
          %197 = sbr.rel (%p195) target = $region20
        $region19: #{tpu_custom_call.1} parent=11 // pred_region
          _
        $region20: #{tpu_custom_call.1} parent=11 // pred_fallthru
          _
        // Predicated region
        $region21: #{tpu_custom_call.1} parent=11 // pred_check
          %p198 = pneg %p130
        $region22: #{tpu_custom_call.1} parent=11 // pred_check_branch
          %200 = sbr.rel (%p198) target = $region24
        $region23: #{tpu_custom_call.1} parent=11 // pred_region
          _
        $region24: #{tpu_custom_call.1} parent=11 // pred_fallthru
          _
        // Predicated region
        $region25: #{tpu_custom_call.1} parent=11 // pred_check
          %p201 = pneg %p151
        $region26: #{tpu_custom_call.1} parent=11 // pred_check_branch
          %203 = sbr.rel (%p201) target = $region28
        $region27: #{tpu_custom_call.1} parent=11 // pred_region
          _
        $region28: #{tpu_custom_call.1} parent=11 // pred_fallthru
          _
      $region12: #{tpu_custom_call.1} parent=5 // pred_fallthru
        _
      %p204 = scmp.lt.s32.totalorder %s15, 2
      // Predicated region
      $region29: #{tpu_custom_call.1} parent=5 // pred_check
        %p205 = pneg %p204
      $region30: #{tpu_custom_call.1} parent=5 // pred_check_branch
        %207 = sbr.rel (%p205) target = $region32
      $region31: #{tpu_custom_call.1} parent=5 // pred_region
        // Predicated region
        $region33: #{tpu_custom_call.1} parent=31 // pred_check
          %p208 = pneg %p35
        $region34: #{tpu_custom_call.1} parent=31 // pred_check_branch
          %210 = sbr.rel (%p208) target = $region36
        $region35: #{tpu_custom_call.1} parent=31 // pred_region
          %p211 = scmp.lt.s32.totalorder %s15, 1
          %s212 = scalar_select %p211, %s15, 1
          %s213 = smul.addr %s212, 2
          %s214 = smul.addr %s213, 4
          %s215 = scalar_lea.vmem %s0, %s214
        $region36: #{tpu_custom_call.1} parent=31 // pred_fallthru
          _
        // Predicated region
        $region37: #{tpu_custom_call.1} parent=31 // pred_check
          %p216 = pneg %p61
        $region38: #{tpu_custom_call.1} parent=31 // pred_check_branch
          %218 = sbr.rel (%p216) target = $region40
        $region39: #{tpu_custom_call.1} parent=31 // pred_region
          %p219 = scmp.lt.s32.totalorder %s15, 1
          %s220 = scalar_select %p219, %s15, 1
          %s221 = smul.addr %s220, 2
          %s222 = smul.addr %s221, 8
          %s223 = scalar_lea.vmem %s1, %s222
        $region40: #{tpu_custom_call.1} parent=31 // pred_fallthru
          _
      $region32: #{tpu_custom_call.1} parent=5 // pred_fallthru
        _
      %p224 = scmp.le.s32.totalorder 1, %s15
      %p225 = scmp.lt.s32.totalorder %s15, 3
      %p226 = pnand %p224, %p225
      %p227 = pneg %p226
      // Predicated region
      $region41: #{tpu_custom_call.1} parent=5 // pred_check
        _
      $region42: #{tpu_custom_call.1} parent=5 // pred_check_branch
        %229 = sbr.rel (%p226) target = $region44
      $region43: #{tpu_custom_call.1} parent=5 // pred_region
        %s230 = ssub.s32 %s15, 1
        %p231 = scmp.lt.s32.totalorder %s20, 1
        %s232 = scalar_select %p231, %s20, 1
        %s233 = smul.addr %s232, 2
        %s234 = smul.addr %s233, 4
        %s235 = scalar_lea.vmem %s0, %s234
        %p236 = pneg %p41
        %p237 = pneg %p38
        %p238 = scmp.lt.s32.totalorder %s20, 1
        %s239 = scalar_select %p238, %s20, 1
        %s240 = smul.addr %s239, 2
        %s241 = smul.addr %s240, 8
        %s242 = scalar_lea.vmem %s1, %s241
        %p243 = pneg %p67
        %p244 = pneg %p64
        %p245 = pneg %p88
        %p246 = pneg %p85
        %p247 = pneg %p109
        %p248 = pneg %p106
        %p249 = pneg %p130
        %p250 = pneg %p127
        %p251 = pneg %p151
        %p252 = pneg %p148
        %p253 = pneg %p177
        %p254 = pneg %p174
        %s255 = sand.u32 %s164, 1
        %s256 = scalar_lea.sflag [#allocation3], %s255
        %s257 = sand.u32 %s164, 1
        %s258 = smul.addr %s257, 8
        %s259 = scalar_lea.vmem [#allocation2], %s258
        %p260 = scmp.lt.s32.totalorder %s20, 1
        %s261 = scalar_select %p260, %s20, 1
        %s262 = smul.addr %s261, 2
        %s263 = smul.addr %s262, 4
        %s264 = scalar_lea.vmem %s0, %s263
        %p265 = scmp.lt.s32.totalorder %s20, 1
        %s266 = scalar_select %p265, %s20, 1
        %s267 = smul.addr %s266, 2
        %s268 = smul.addr %s267, 8
        %s269 = scalar_lea.vmem %s1, %s268
        %v270 = vld [vmem:[%s264] sm:$0xff]
        %v271 = vld [vmem:[%s269] sm:$0x3f]
        %v272 = vld [vmem:[%s269 + $0x8] sm:$0x3f]
        %v273 = vld [vmem:[%s2] sm:$0xf]
        %v274 = vld [vmem:[%s3] sm:$0xff]
        %v275 = vld [vmem:[%s3 + $0x8] sm:$0xff]
        %v276 = vld [vmem:[%s3 + $0x10] sm:$0x1f]
        %v277 = vld [vmem:[%s4] sm:$0xf]
        %v278 = vld [vmem:[%s5] sm:$0xf]
        %280 = vst [vmem:[#allocation1] ss:$2 sm:$0xff] %v270
        %v281 = vld.sshfl [vmem:[#allocation1] sm:$0xff pattern:$0x75316420]
        %v282 = vld.sshfl [vmem:[#allocation1 + $0x8] sm:$0xff pattern:$0x75316420]
        %vm285 = vcmask 1043456
        %v286 = vsel %vm285, %v281, 0.0
        %v287 = vrot.slane %v286, 4
        %v288 = vadd.f32 %v286, %v287
        %v289 = vrot.slane %v288, 2
        %v290 = vadd.f32 %v288, %v289
        %v291 = vrot.slane %v290, 1
        %v292 = vadd.f32 %v290, %v291
        %v293 = vsel %vm285, %v282, 0.0
        %v294 = vrot.slane %v293, 4
        %v295 = vadd.f32 %v293, %v294
        %v296 = vrot.slane %v295, 2
        %v297 = vadd.f32 %v295, %v296
        %v298 = vrot.slane %v297, 1
        %v299 = vadd.f32 %v297, %v298
        %v300 = vrcp.pop 4.0
        %v301 = vmul.f32 4.0, %v300
        %v302 = vsub.f32 1.0, %v301
        %v303 = vmul.f32 %v300, %v302
        %v304 = vadd.f32 %v300, %v303
        %vm305 = vweird.f32 %v300
        %v306 = vsel %vm305, %v300, %v304
        %v307 = vmul.f32 %v292, %v306
        %v308 = vmul.f32 %v299, %v306
        %309 = vst [vmem:[#allocation1] ss:$2 sm:$0xff] %v270
        %v310 = vld.sshfl [vmem:[#allocation1] sm:$0xff pattern:$0x75316420]
        %v311 = vld.sshfl [vmem:[#allocation1 + $0x8] sm:$0xff pattern:$0x75316420]
        %v314 = vsel %vm285, %v310, -inf
        %v315 = vrot.slane %v314, 4
        %v316 = vmax.f32 %v314, %v315
        %v317 = vrot.slane %v316, 2
        %v318 = vmax.f32 %v316, %v317
        %v319 = vrot.slane %v318, 1
        %v320 = vmax.f32 %v318, %v319
        %v321 = vsel %vm285, %v311, -inf
        %v322 = vrot.slane %v321, 4
        %v323 = vmax.f32 %v321, %v322
        %v324 = vrot.slane %v323, 2
        %v325 = vmax.f32 %v323, %v324
        %v326 = vrot.slane %v325, 1
        %v327 = vmax.f32 %v325, %v326
        %v328 = vmul.f32 %v270, %v270
        %vm329 = vcmask 1045504
        %v330 = vsel %vm329, %v271, -inf
        %v331 = vrot.slane %v330, 4
        %v332 = vmax.f32 %v330, %v331
        %v333 = vrot.slane %v332, 2
        %v334 = vmax.f32 %v332, %v333
        %v335 = vrot.slane %v334, 1
        %v336 = vmax.f32 %v334, %v335
        %v337 = vsel %vm329, %v272, -inf
        %v338 = vrot.slane %v337, 4
        %v339 = vmax.f32 %v337, %v338
        %v340 = vrot.slane %v339, 2
        %v341 = vmax.f32 %v339, %v340
        %v342 = vrot.slane %v341, 1
        %v343 = vmax.f32 %v341, %v342
        %v344 = vsub.f32 %v271, %v336
        %v345 = vsub.f32 %v272, %v343
        %v346 = vmul.f32 %v344, 1.442695
        %v347 = vpow.pop %v346
        %v348 = vmul.f32 %v345, 1.442695
        %v349 = vpow.pop %v348
        %v350 = vsel %vm329, %v347, 0.0
        %v351 = vrot.slane %v350, 4
        %v352 = vadd.f32 %v350, %v351
        %v353 = vrot.slane %v352, 2
        %v354 = vadd.f32 %v352, %v353
        %v355 = vrot.slane %v354, 1
        %v356 = vadd.f32 %v354, %v355
        %v357 = vsel %vm329, %v349, 0.0
        %v358 = vrot.slane %v357, 4
        %v359 = vadd.f32 %v357, %v358
        %v360 = vrot.slane %v359, 2
        %v361 = vadd.f32 %v359, %v360
        %v362 = vrot.slane %v361, 1
        %v363 = vadd.f32 %v361, %v362
        %v364 = vrcp.pop %v356
        %v365 = vmul.f32 %v356, %v364
        %v366 = vsub.f32 1.0, %v365
        %v367 = vmul.f32 %v364, %v366
        %v368 = vadd.f32 %v364, %v367
        %vm369 = vweird.f32 %v356
        %vm370 = vweird.f32 %v364
        %vm371 = vmor %vm369, %vm370
        %v372 = vsel %vm371, %v364, %v368
        %v373 = vand.u32 2147483647, %v356
        %vm374 = vcmp.eq.f32.partialorder %v373, 8.507059e+37
        %v375 = vand.u32 %v356, 2147483648
        %v376 = vor.u32 1.1754944e-38, %v375
        %v377 = vsel %vm374, %v376, %v372
        %v378 = vmul.f32 1.0, %v377
        %v379 = vrcp.pop %v363
        %v380 = vmul.f32 %v363, %v379
        %v381 = vsub.f32 1.0, %v380
        %v382 = vmul.f32 %v379, %v381
        %v383 = vadd.f32 %v379, %v382
        %vm384 = vweird.f32 %v363
        %vm385 = vweird.f32 %v379
        %vm386 = vmor %vm384, %vm385
        %v387 = vsel %vm386, %v379, %v383
        %v388 = vand.u32 2147483647, %v363
        %vm389 = vcmp.eq.f32.partialorder %v388, 8.507059e+37
        %v390 = vand.u32 %v363, 2147483648
        %v391 = vor.u32 1.1754944e-38, %v390
        %v392 = vsel %vm389, %v391, %v387
        %v393 = vmul.f32 1.0, %v392
        %v396 = vrot.slane %v347, 1
        %v397 = vrot.slane %v349, 1
        %v400 = vrot.slane %v347, 2
        %v401 = vrot.slane %v349, 2
        %v404 = vrot.slane %v347, 3
        %v405 = vrot.slane %v349, 3
        %vm408 = vcmask 1040384
        %v409 = vsel %vm408, %v396, %v400
        %v410 = vsel %vm408, %v397, %v401
        %vm411 = vcmask 1041408
        %v412 = vsel %vm411, %v409, %v404
        %v413 = vsel %vm411, %v410, %v405
        %v414 = vmul.f32 %v412, %v378
        %v415 = vmul.f32 %v413, %v393
        %v416 = vmul.f32 %v414, %v307
        %v417 = vmul.f32 %v415, %v308
        %v418 = vmul.f32 %v414, %v320
        %v419 = vmul.f32 %v415, %v327
        %v422 = vrot.slane %v418, 5
        %v423 = vrot.slane %v419, 5
        %v428 = vrot.slane %v414, 2
        %v429 = vrot.slane %v415, 2
        %vm432 = vcmask 1042432
        %v433 = vsel %vm432, %v416, %v422
        %v434 = vsel %vm432, %v417, %v423
        %v435 = vsel %vm329, %v433, %v428
        %v436 = vsel %vm329, %v434, %v429
        %437 = vrot.lane.b32.xlu0 %v435, 3
        %v438 = vpop.permute.xlu0 %437
        %439 = vrot.lane.b32.xlu0 %v428, 3
        %v440 = vpop.permute.xlu0 %439
        %441 = vrot.lane.b32.xlu0 %v436, 3
        %v442 = vpop.permute.xlu0 %441
        %443 = vrot.lane.b32.xlu0 %v429, 3
        %v444 = vpop.permute.xlu0 %443
        %v445 = vlaneseq
        %v446 = vand.u32 %v445, 127
        %vm447 = vcmp.lt.s32.totalorder %v446, 3
        %v448 = vsel %vm447, %v438, %v442
        %v449 = vsel %vm447, %v440, %v444
        %v450 = vsel %vm447, %v442, %v438
        %v451 = vsel %vm447, %v444, %v440
        %v452 = vadd.s32 %v273, 4294967293
        %vm453 = vcmp.ge.s32.totalorder %v452, 0
        %vm454 = vcmp.lt.s32.totalorder %v452, 16
        %vm455 = vmand %vm453, %vm454
        %v456 = vsel %vm455, 1, 0
        %v457 = vperm.slane %v456, 0
        %v458 = vperm.slane %v456, 2
        %v459 = vperm.slane %v457, 0
        %v460 = vperm.slane %v458, 0
        %vm461 = vcmp.eq.s32.totalorder %v459, 1
        %vm462 = vcmp.eq.s32.totalorder %v460, 1
        %v463 = vsel %vm461, %v450, 0.0
        %v464 = vsel %vm462, %v448, 0.0
        %v465 = vsel %vm461, %v451, 0.0
        %v466 = vsel %vm462, %v449, 0.0
        %467 = vrot.lane.b32.xlu0 %v435, 2
        %v468 = vpop.permute.xlu0 %467
        %469 = vrot.lane.b32.xlu0 %v428, 2
        %v470 = vpop.permute.xlu0 %469
        %471 = vrot.lane.b32.xlu0 %v436, 2
        %v472 = vpop.permute.xlu0 %471
        %473 = vrot.lane.b32.xlu0 %v429, 2
        %v474 = vpop.permute.xlu0 %473
        %vm475 = vcmp.lt.s32.totalorder %v446, 2
        %v476 = vsel %vm475, %v468, %v472
        %v477 = vsel %vm475, %v470, %v474
        %v478 = vsel %vm475, %v472, %v468
        %v479 = vsel %vm475, %v474, %v470
        %v480 = vadd.s32 %v273, 4294967294
        %vm481 = vcmp.ge.s32.totalorder %v480, 0
        %vm482 = vcmp.lt.s32.totalorder %v480, 16
        %vm483 = vmand %vm481, %vm482
        %v484 = vsel %vm483, 1, 0
        %v485 = vperm.slane %v484, 0
        %v486 = vperm.slane %v484, 2
        %v487 = vperm.slane %v485, 0
        %v488 = vperm.slane %v486, 0
        %vm489 = vcmp.eq.s32.totalorder %v487, 1
        %vm490 = vcmp.eq.s32.totalorder %v488, 1
        %v491 = vsel %vm489, %v478, 0.0
        %v492 = vsel %vm490, %v476, 0.0
        %v493 = vsel %vm489, %v479, 0.0
        %v494 = vsel %vm490, %v477, 0.0
        %495 = vrot.lane.b32.xlu0 %v435, 1
        %v496 = vpop.permute.xlu0 %495
        %497 = vrot.lane.b32.xlu0 %v428, 1
        %v498 = vpop.permute.xlu0 %497
        %499 = vrot.lane.b32.xlu0 %v436, 1
        %v500 = vpop.permute.xlu0 %499
        %501 = vrot.lane.b32.xlu0 %v429, 1
        %v502 = vpop.permute.xlu0 %501
        %vm503 = vcmp.lt.s32.totalorder %v446, 1
        %v504 = vsel %vm503, %v496, %v500
        %v505 = vsel %vm503, %v498, %v502
        %v506 = vsel %vm503, %v500, %v496
        %v507 = vsel %vm503, %v502, %v498
        %v508 = vadd.s32 %v273, 4294967295
        %vm509 = vcmp.ge.s32.totalorder %v508, 0
        %vm510 = vcmp.lt.s32.totalorder %v508, 16
        %vm511 = vmand %vm509, %vm510
        %v512 = vsel %vm511, 1, 0
        %v513 = vperm.slane %v512, 0
        %v514 = vperm.slane %v512, 2
        %v515 = vperm.slane %v513, 0
        %v516 = vperm.slane %v514, 0
        %vm517 = vcmp.eq.s32.totalorder %v515, 1
        %vm518 = vcmp.eq.s32.totalorder %v516, 1
        %v519 = vsel %vm517, %v506, 0.0
        %v520 = vsel %vm518, %v504, 0.0
        %v521 = vsel %vm517, %v507, 0.0
        %v522 = vsel %vm518, %v505, 0.0
        %523 = vrot.lane.b32.xlu0 %v435, 127
        %v524 = vpop.permute.xlu0 %523
        %525 = vrot.lane.b32.xlu0 %v428, 127
        %v526 = vpop.permute.xlu0 %525
        %527 = vrot.lane.b32.xlu0 %v436, 127
        %v528 = vpop.permute.xlu0 %527
        %529 = vrot.lane.b32.xlu0 %v429, 127
        %v530 = vpop.permute.xlu0 %529
        %vm531 = vcmp.lt.s32.totalorder %v446, 127
        %v532 = vsel %vm531, %v524, %v528
        %v533 = vsel %vm531, %v526, %v530
        %v534 = vsel %vm531, %v528, %v524
        %v535 = vsel %vm531, %v530, %v526
        %v536 = vadd.s32 %v273, 1
        %vm537 = vcmp.ge.s32.totalorder %v536, 0
        %vm538 = vcmp.lt.s32.totalorder %v536, 16
        %vm539 = vmand %vm537, %vm538
        %v540 = vsel %vm539, 1, 0
        %v541 = vperm.slane %v540, 0
        %v542 = vperm.slane %v540, 2
        %v543 = vperm.slane %v541, 0
        %v544 = vperm.slane %v542, 0
        %vm545 = vcmp.eq.s32.totalorder %v543, 1
        %vm546 = vcmp.eq.s32.totalorder %v544, 1
        %v547 = vsel %vm545, %v532, 0.0
        %v548 = vsel %vm546, %v534, 0.0
        %v549 = vsel %vm545, %v533, 0.0
        %v550 = vsel %vm546, %v535, 0.0
        %551 = vrot.lane.b32.xlu0 %v435, 126
        %v552 = vpop.permute.xlu0 %551
        %553 = vrot.lane.b32.xlu0 %v428, 126
        %v554 = vpop.permute.xlu0 %553
        %555 = vrot.lane.b32.xlu0 %v436, 126
        %v556 = vpop.permute.xlu0 %555
        %557 = vrot.lane.b32.xlu0 %v429, 126
        %v558 = vpop.permute.xlu0 %557
        %vm559 = vcmp.lt.s32.totalorder %v446, 126
        %v560 = vsel %vm559, %v552, %v556
        %v561 = vsel %vm559, %v554, %v558
        %v562 = vsel %vm559, %v556, %v552
        %v563 = vsel %vm559, %v558, %v554
        %v564 = vadd.s32 %v273, 2
        %vm565 = vcmp.ge.s32.totalorder %v564, 0
        %vm566 = vcmp.lt.s32.totalorder %v564, 16
        %vm567 = vmand %vm565, %vm566
        %v568 = vsel %vm567, 1, 0
        %v569 = vperm.slane %v568, 0
        %v570 = vperm.slane %v568, 2
        %v571 = vperm.slane %v569, 0
        %v572 = vperm.slane %v570, 0
        %vm573 = vcmp.eq.s32.totalorder %v571, 1
        %vm574 = vcmp.eq.s32.totalorder %v572, 1
        %v575 = vsel %vm573, %v560, 0.0
        %v576 = vsel %vm574, %v562, 0.0
        %v577 = vsel %vm573, %v561, 0.0
        %v578 = vsel %vm574, %v563, 0.0
        %579 = vrot.lane.b32.xlu0 %v435, 125
        %v580 = vpop.permute.xlu0 %579
        %581 = vrot.lane.b32.xlu0 %v428, 125
        %v582 = vpop.permute.xlu0 %581
        %583 = vrot.lane.b32.xlu0 %v436, 125
        %v584 = vpop.permute.xlu0 %583
        %585 = vrot.lane.b32.xlu0 %v429, 125
        %v586 = vpop.permute.xlu0 %585
        %vm587 = vcmp.lt.s32.totalorder %v446, 125
        %v588 = vsel %vm587, %v580, %v584
        %v589 = vsel %vm587, %v582, %v586
        %v590 = vsel %vm587, %v584, %v580
        %v591 = vsel %vm587, %v586, %v582
        %v592 = vadd.s32 %v273, 3
        %vm593 = vcmp.ge.s32.totalorder %v592, 0
        %vm594 = vcmp.lt.s32.totalorder %v592, 16
        %vm595 = vmand %vm593, %vm594
        %v596 = vsel %vm595, 1, 0
        %v597 = vperm.slane %v596, 0
        %v598 = vperm.slane %v596, 2
        %v599 = vperm.slane %v597, 0
        %v600 = vperm.slane %v598, 0
        %vm601 = vcmp.eq.s32.totalorder %v599, 1
        %vm602 = vcmp.eq.s32.totalorder %v600, 1
        %v603 = vsel %vm601, %v588, 0.0
        %v604 = vsel %vm602, %v590, 0.0
        %v605 = vsel %vm601, %v589, 0.0
        %v606 = vsel %vm602, %v591, 0.0
        %v611 = vrot.slane %v491, 7
        %v612 = vrot.slane %v492, 7
        %v613 = vrot.slane %v493, 7
        %v614 = vsel %vm408, %v611, %v613
        %v615 = vrot.slane %v494, 7
        %v616 = vsel %vm408, %v612, %v615
        %v625 = vrot.slane %v519, 6
        %v626 = vrot.slane %v520, 6
        %v627 = vrot.slane %v521, 6
        %v628 = vsel %vm411, %v625, %v627
        %v629 = vrot.slane %v522, 6
        %v630 = vsel %vm411, %v626, %v629
        %v637 = vrot.slane %v435, 5
        %v638 = vrot.slane %v436, 5
        %v639 = vrot.slane %v428, 5
        %v640 = vsel %vm432, %v637, %v639
        %v641 = vrot.slane %v429, 5
        %v642 = vsel %vm432, %v638, %v641
        %v651 = vrot.slane %v547, 4
        %v652 = vrot.slane %v548, 4
        %v653 = vrot.slane %v549, 4
        %v654 = vsel %vm285, %v651, %v653
        %v655 = vrot.slane %v550, 4
        %v656 = vsel %vm285, %v652, %v655
        %vm665 = vcmask 1044480
        %v666 = vrot.slane %v575, 3
        %v667 = vrot.slane %v576, 3
        %v668 = vrot.slane %v577, 3
        %v669 = vsel %vm665, %v666, %v668
        %v670 = vrot.slane %v578, 3
        %v671 = vsel %vm665, %v667, %v670
        %v680 = vrot.slane %v603, 2
        %v681 = vrot.slane %v604, 2
        %v682 = vrot.slane %v605, 2
        %v683 = vsel %vm329, %v680, %v682
        %v684 = vrot.slane %v606, 2
        %v685 = vsel %vm329, %v681, %v684
        %v688 = vsel %vm408, %v465, %v611
        %v689 = vsel %vm408, %v466, %v612
        %v690 = vsel %vm411, %v614, %v625
        %v691 = vsel %vm411, %v616, %v626
        %v692 = vsel %vm432, %v628, %v637
        %v693 = vsel %vm432, %v630, %v638
        %v694 = vsel %vm285, %v640, %v651
        %v695 = vsel %vm285, %v642, %v652
        %v696 = vsel %vm665, %v654, %v666
        %v697 = vsel %vm665, %v656, %v667
        %v698 = vsel %vm329, %v669, %v680
        %v699 = vsel %vm329, %v671, %v681
        %vm700 = vcmask 515072
        %v702 = vsel %vm700, %v274, 0
        %v705 = vsel %vm700, %v275, 0
        %v708 = vsel %vm700, %v276, 0
        %vm710 = vcmask 1046528
        %v711 = vsel %vm710, %v683, 0
        %v713 = vsel %vm710, %v685, 0
        %715 = vmatpush.msra.mxu0 0.0
        %716 = vmatpush.msra.mxu0 0.0
        %717 = vmatpush.msra.mxu0 0.0
        %718 = vmatpush.msra.mxu0 0.0
        %719 = vmatpush.msra.mxu0 0.0
        %720 = vmatpush.msra.mxu0 0.0
        %721 = vmatpush.msra.mxu0 0.0
        %722 = vmatpush.msra.mxu0 0.0
        %v723 = vand.u32 %v711, 4294901760
        %724 = vmatpush.msra.mxu0 %v723
        %v725 = vand.u32 %v698, 4294901760
        %726 = vmatpush.msra.mxu0 %v725
        %v727 = vand.u32 %v696, 4294901760
        %728 = vmatpush.msra.mxu0 %v727
        %v729 = vand.u32 %v694, 4294901760
        %730 = vmatpush.msra.mxu0 %v729
        %v731 = vand.u32 %v692, 4294901760
        %732 = vmatpush.msra.mxu0 %v731
        %v733 = vand.u32 %v690, 4294901760
        %734 = vmatpush.msra.mxu0 %v733
        %v735 = vand.u32 %v688, 4294901760
        %736 = vmatpush.msra.mxu0 %v735
        %v737 = vand.u32 %v463, 4294901760
        %738 = vmatpush.msra.mxu0 %v737
        %v739 = vand.u32 %v702, 4294901760
        %v740 = vsub.f32 %v702, %v739
        %v741 = vand.u32 %v740, 4294901760
        %v742 = vsub.f32 %v740, %v741
        %v743 = vand.u32 %v742, 4294901760
        %744 = vmatmul.f32.gmra.mxu0 %v743
        %v745 = vpop.f32.mrf.mxu0
        %v746 = vadd.f32 0.0, %v745
        %v747 = vand.u32 %v705, 4294901760
        %v748 = vsub.f32 %v705, %v747
        %v749 = vand.u32 %v748, 4294901760
        %v750 = vsub.f32 %v748, %v749
        %v751 = vand.u32 %v750, 4294901760
        %752 = vmatmul.f32.gmra.mxu0 %v751
        %v753 = vpop.f32.mrf.mxu0
        %v754 = vadd.f32 0.0, %v753
        %v755 = vand.u32 %v708, 4294901760
        %v756 = vsub.f32 %v708, %v755
        %v757 = vand.u32 %v756, 4294901760
        %v758 = vsub.f32 %v756, %v757
        %v759 = vand.u32 %v758, 4294901760
        %760 = vmatmul.f32.gmra.mxu0 %v759
        %v761 = vpop.f32.mrf.mxu0
        %v762 = vadd.f32 0.0, %v761
        %763 = vdwg.mxu0
        %764 = vmatpush.msra.mxu0 0.0
        %765 = vmatpush.msra.mxu0 0.0
        %766 = vmatpush.msra.mxu0 0.0
        %767 = vmatpush.msra.mxu0 0.0
        %768 = vmatpush.msra.mxu0 0.0
        %769 = vmatpush.msra.mxu0 0.0
        %770 = vmatpush.msra.mxu0 0.0
        %771 = vmatpush.msra.mxu0 0.0
        %v772 = vand.u32 %v711, 4294901760
        %v773 = vsub.f32 %v711, %v772
        %v774 = vand.u32 %v773, 4294901760
        %v775 = vsub.f32 %v773, %v774
        %v776 = vand.u32 %v775, 4294901760
        %777 = vmatpush.msra.mxu0 %v776
        %v778 = vand.u32 %v698, 4294901760
        %v779 = vsub.f32 %v698, %v778
        %v780 = vand.u32 %v779, 4294901760
        %v781 = vsub.f32 %v779, %v780
        %v782 = vand.u32 %v781, 4294901760
        %783 = vmatpush.msra.mxu0 %v782
        %v784 = vand.u32 %v696, 4294901760
        %v785 = vsub.f32 %v696, %v784
        %v786 = vand.u32 %v785, 4294901760
        %v787 = vsub.f32 %v785, %v786
        %v788 = vand.u32 %v787, 4294901760
        %789 = vmatpush.msra.mxu0 %v788
        %v790 = vand.u32 %v694, 4294901760
        %v791 = vsub.f32 %v694, %v790
        %v792 = vand.u32 %v791, 4294901760
        %v793 = vsub.f32 %v791, %v792
        %v794 = vand.u32 %v793, 4294901760
        %795 = vmatpush.msra.mxu0 %v794
        %v796 = vand.u32 %v692, 4294901760
        %v797 = vsub.f32 %v692, %v796
        %v798 = vand.u32 %v797, 4294901760
        %v799 = vsub.f32 %v797, %v798
        %v800 = vand.u32 %v799, 4294901760
        %801 = vmatpush.msra.mxu0 %v800
        %v802 = vand.u32 %v690, 4294901760
        %v803 = vsub.f32 %v690, %v802
        %v804 = vand.u32 %v803, 4294901760
        %v805 = vsub.f32 %v803, %v804
        %v806 = vand.u32 %v805, 4294901760
        %807 = vmatpush.msra.mxu0 %v806
        %v808 = vand.u32 %v688, 4294901760
        %v809 = vsub.f32 %v688, %v808
        %v810 = vand.u32 %v809, 4294901760
        %v811 = vsub.f32 %v809, %v810
        %v812 = vand.u32 %v811, 4294901760
        %813 = vmatpush.msra.mxu0 %v812
        %v814 = vand.u32 %v463, 4294901760
        %v815 = vsub.f32 %v463, %v814
        %v816 = vand.u32 %v815, 4294901760
        %v817 = vsub.f32 %v815, %v816
        %v818 = vand.u32 %v817, 4294901760
        %819 = vmatpush.msra.mxu0 %v818
        %v820 = vand.u32 %v702, 4294901760
        %821 = vmatmul.f32.gmra.mxu0 %v820
        %v822 = vpop.f32.mrf.mxu0
        %v823 = vadd.f32 %v746, %v822
        %v824 = vand.u32 %v705, 4294901760
        %825 = vmatmul.f32.gmra.mxu0 %v824
        %v826 = vpop.f32.mrf.mxu0
        %v827 = vadd.f32 %v754, %v826
        %v828 = vand.u32 %v708, 4294901760
        %829 = vmatmul.f32.gmra.mxu0 %v828
        %v830 = vpop.f32.mrf.mxu0
        %v831 = vadd.f32 %v762, %v830
        %832 = vdwg.mxu0
        %833 = vmatpush.msra.mxu0 0.0
        %834 = vmatpush.msra.mxu0 0.0
        %835 = vmatpush.msra.mxu0 0.0
        %836 = vmatpush.msra.mxu0 0.0
        %837 = vmatpush.msra.mxu0 0.0
        %838 = vmatpush.msra.mxu0 0.0
        %839 = vmatpush.msra.mxu0 0.0
        %840 = vmatpush.msra.mxu0 0.0
        %v841 = vand.u32 %v711, 4294901760
        %v842 = vsub.f32 %v711, %v841
        %843 = vmatpush.msra.mxu0 %v842
        %v844 = vand.u32 %v698, 4294901760
        %v845 = vsub.f32 %v698, %v844
        %846 = vmatpush.msra.mxu0 %v845
        %v847 = vand.u32 %v696, 4294901760
        %v848 = vsub.f32 %v696, %v847
        %849 = vmatpush.msra.mxu0 %v848
        %v850 = vand.u32 %v694, 4294901760
        %v851 = vsub.f32 %v694, %v850
        %852 = vmatpush.msra.mxu0 %v851
        %v853 = vand.u32 %v692, 4294901760
        %v854 = vsub.f32 %v692, %v853
        %855 = vmatpush.msra.mxu0 %v854
        %v856 = vand.u32 %v690, 4294901760
        %v857 = vsub.f32 %v690, %v856
        %858 = vmatpush.msra.mxu0 %v857
        %v859 = vand.u32 %v688, 4294901760
        %v860 = vsub.f32 %v688, %v859
        %861 = vmatpush.msra.mxu0 %v860
        %v862 = vand.u32 %v463, 4294901760
        %v863 = vsub.f32 %v463, %v862
        %864 = vmatpush.msra.mxu0 %v863
        %v865 = vand.u32 %v702, 4294901760
        %v866 = vsub.f32 %v702, %v865
        %867 = vmatmul.f32.gmra.mxu0 %v866
        %v868 = vpop.f32.mrf.mxu0
        %v869 = vadd.f32 %v823, %v868
        %v870 = vand.u32 %v705, 4294901760
        %v871 = vsub.f32 %v705, %v870
        %872 = vmatmul.f32.gmra.mxu0 %v871
        %v873 = vpop.f32.mrf.mxu0
        %v874 = vadd.f32 %v827, %v873
        %v875 = vand.u32 %v708, 4294901760
        %v876 = vsub.f32 %v708, %v875
        %877 = vmatmul.f32.gmra.mxu0 %v876
        %v878 = vpop.f32.mrf.mxu0
        %v879 = vadd.f32 %v831, %v878
        %880 = vdwg.mxu0
        %881 = vmatpush.msra.mxu0 0.0
        %882 = vmatpush.msra.mxu0 0.0
        %883 = vmatpush.msra.mxu0 0.0
        %884 = vmatpush.msra.mxu0 0.0
        %885 = vmatpush.msra.mxu0 0.0
        %886 = vmatpush.msra.mxu0 0.0
        %887 = vmatpush.msra.mxu0 0.0
        %888 = vmatpush.msra.mxu0 0.0
        %v889 = vand.u32 %v711, 4294901760
        %890 = vmatpush.msra.mxu0 %v889
        %v891 = vand.u32 %v698, 4294901760
        %892 = vmatpush.msra.mxu0 %v891
        %v893 = vand.u32 %v696, 4294901760
        %894 = vmatpush.msra.mxu0 %v893
        %v895 = vand.u32 %v694, 4294901760
        %896 = vmatpush.msra.mxu0 %v895
        %v897 = vand.u32 %v692, 4294901760
        %898 = vmatpush.msra.mxu0 %v897
        %v899 = vand.u32 %v690, 4294901760
        %900 = vmatpush.msra.mxu0 %v899
        %v901 = vand.u32 %v688, 4294901760
        %902 = vmatpush.msra.mxu0 %v901
        %v903 = vand.u32 %v463, 4294901760
        %904 = vmatpush.msra.mxu0 %v903
        %v905 = vand.u32 %v702, 4294901760
        %v906 = vsub.f32 %v702, %v905
        %v907 = vand.u32 %v906, 4294901760
        %908 = vmatmul.f32.gmra.mxu0 %v907
        %v909 = vpop.f32.mrf.mxu0
        %v910 = vadd.f32 %v869, %v909
        %v911 = vand.u32 %v705, 4294901760
        %v912 = vsub.f32 %v705, %v911
        %v913 = vand.u32 %v912, 4294901760
        %914 = vmatmul.f32.gmra.mxu0 %v913
        %v915 = vpop.f32.mrf.mxu0
        %v916 = vadd.f32 %v874, %v915
        %v917 = vand.u32 %v708, 4294901760
        %v918 = vsub.f32 %v708, %v917
        %v919 = vand.u32 %v918, 4294901760
        %920 = vmatmul.f32.gmra.mxu0 %v919
        %v921 = vpop.f32.mrf.mxu0
        %v922 = vadd.f32 %v879, %v921
        %923 = vdwg.mxu0
        %924 = vmatpush.msra.mxu0 0.0
        %925 = vmatpush.msra.mxu0 0.0
        %926 = vmatpush.msra.mxu0 0.0
        %927 = vmatpush.msra.mxu0 0.0
        %928 = vmatpush.msra.mxu0 0.0
        %929 = vmatpush.msra.mxu0 0.0
        %930 = vmatpush.msra.mxu0 0.0
        %931 = vmatpush.msra.mxu0 0.0
        %v932 = vand.u32 %v711, 4294901760
        %v933 = vsub.f32 %v711, %v932
        %v934 = vand.u32 %v933, 4294901760
        %935 = vmatpush.msra.mxu0 %v934
        %v936 = vand.u32 %v698, 4294901760
        %v937 = vsub.f32 %v698, %v936
        %v938 = vand.u32 %v937, 4294901760
        %939 = vmatpush.msra.mxu0 %v938
        %v940 = vand.u32 %v696, 4294901760
        %v941 = vsub.f32 %v696, %v940
        %v942 = vand.u32 %v941, 4294901760
        %943 = vmatpush.msra.mxu0 %v942
        %v944 = vand.u32 %v694, 4294901760
        %v945 = vsub.f32 %v694, %v944
        %v946 = vand.u32 %v945, 4294901760
        %947 = vmatpush.msra.mxu0 %v946
        %v948 = vand.u32 %v692, 4294901760
        %v949 = vsub.f32 %v692, %v948
        %v950 = vand.u32 %v949, 4294901760
        %951 = vmatpush.msra.mxu0 %v950
        %v952 = vand.u32 %v690, 4294901760
        %v953 = vsub.f32 %v690, %v952
        %v954 = vand.u32 %v953, 4294901760
        %955 = vmatpush.msra.mxu0 %v954
        %v956 = vand.u32 %v688, 4294901760
        %v957 = vsub.f32 %v688, %v956
        %v958 = vand.u32 %v957, 4294901760
        %959 = vmatpush.msra.mxu0 %v958
        %v960 = vand.u32 %v463, 4294901760
        %v961 = vsub.f32 %v463, %v960
        %v962 = vand.u32 %v961, 4294901760
        %963 = vmatpush.msra.mxu0 %v962
        %v964 = vand.u32 %v702, 4294901760
        %965 = vmatmul.f32.gmra.mxu0 %v964
        %v966 = vpop.f32.mrf.mxu0
        %v967 = vadd.f32 %v910, %v966
        %v968 = vand.u32 %v705, 4294901760
        %969 = vmatmul.f32.gmra.mxu0 %v968
        %v970 = vpop.f32.mrf.mxu0
        %v971 = vadd.f32 %v916, %v970
        %v972 = vand.u32 %v708, 4294901760
        %973 = vmatmul.f32.gmra.mxu0 %v972
        %v974 = vpop.f32.mrf.mxu0
        %v975 = vadd.f32 %v922, %v974
        %976 = vdwg.mxu0
        %977 = vmatpush.msra.mxu0 0.0
        %978 = vmatpush.msra.mxu0 0.0
        %979 = vmatpush.msra.mxu0 0.0
        %980 = vmatpush.msra.mxu0 0.0
        %981 = vmatpush.msra.mxu0 0.0
        %982 = vmatpush.msra.mxu0 0.0
        %983 = vmatpush.msra.mxu0 0.0
        %984 = vmatpush.msra.mxu0 0.0
        %v985 = vand.u32 %v711, 4294901760
        %986 = vmatpush.msra.mxu0 %v985
        %v987 = vand.u32 %v698, 4294901760
        %988 = vmatpush.msra.mxu0 %v987
        %v989 = vand.u32 %v696, 4294901760
        %990 = vmatpush.msra.mxu0 %v989
        %v991 = vand.u32 %v694, 4294901760
        %992 = vmatpush.msra.mxu0 %v991
        %v993 = vand.u32 %v692, 4294901760
        %994 = vmatpush.msra.mxu0 %v993
        %v995 = vand.u32 %v690, 4294901760
        %996 = vmatpush.msra.mxu0 %v995
        %v997 = vand.u32 %v688, 4294901760
        %998 = vmatpush.msra.mxu0 %v997
        %v999 = vand.u32 %v463, 4294901760
        %1000 = vmatpush.msra.mxu0 %v999
        %v1001 = vand.u32 %v702, 4294901760
        %1002 = vmatmul.f32.gmra.mxu0 %v1001
        %v1003 = vpop.f32.mrf.mxu0
        %v1004 = vadd.f32 %v967, %v1003
        %v1005 = vand.u32 %v705, 4294901760
        %1006 = vmatmul.f32.gmra.mxu0 %v1005
        %v1007 = vpop.f32.mrf.mxu0
        %v1008 = vadd.f32 %v971, %v1007
        %v1009 = vand.u32 %v708, 4294901760
        %1010 = vmatmul.f32.gmra.mxu0 %v1009
        %v1011 = vpop.f32.mrf.mxu0
        %v1012 = vadd.f32 %v975, %v1011
        %1013 = vdwg.mxu0
        %1014 = vmatpush.msra.mxu0 0.0
        %1015 = vmatpush.msra.mxu0 0.0
        %1016 = vmatpush.msra.mxu0 0.0
        %1017 = vmatpush.msra.mxu0 0.0
        %1018 = vmatpush.msra.mxu0 0.0
        %1019 = vmatpush.msra.mxu0 0.0
        %1020 = vmatpush.msra.mxu0 0.0
        %1021 = vmatpush.msra.mxu0 0.0
        %v1022 = vand.u32 %v713, 4294901760
        %1023 = vmatpush.msra.mxu0 %v1022
        %v1024 = vand.u32 %v699, 4294901760
        %1025 = vmatpush.msra.mxu0 %v1024
        %v1026 = vand.u32 %v697, 4294901760
        %1027 = vmatpush.msra.mxu0 %v1026
        %v1028 = vand.u32 %v695, 4294901760
        %1029 = vmatpush.msra.mxu0 %v1028
        %v1030 = vand.u32 %v693, 4294901760
        %1031 = vmatpush.msra.mxu0 %v1030
        %v1032 = vand.u32 %v691, 4294901760
        %1033 = vmatpush.msra.mxu0 %v1032
        %v1034 = vand.u32 %v689, 4294901760
        %1035 = vmatpush.msra.mxu0 %v1034
        %v1036 = vand.u32 %v464, 4294901760
        %1037 = vmatpush.msra.mxu0 %v1036
        %v1038 = vand.u32 %v702, 4294901760
        %v1039 = vsub.f32 %v702, %v1038
        %v1040 = vand.u32 %v1039, 4294901760
        %v1041 = vsub.f32 %v1039, %v1040
        %v1042 = vand.u32 %v1041, 4294901760
        %1043 = vmatmul.f32.gmra.mxu0 %v1042
        %v1044 = vpop.f32.mrf.mxu0
        %v1045 = vadd.f32 0.0, %v1044
        %v1046 = vand.u32 %v705, 4294901760
        %v1047 = vsub.f32 %v705, %v1046
        %v1048 = vand.u32 %v1047, 4294901760
        %v1049 = vsub.f32 %v1047, %v1048
        %v1050 = vand.u32 %v1049, 4294901760
        %1051 = vmatmul.f32.gmra.mxu0 %v1050
        %v1052 = vpop.f32.mrf.mxu0
        %v1053 = vadd.f32 0.0, %v1052
        %v1054 = vand.u32 %v708, 4294901760
        %v1055 = vsub.f32 %v708, %v1054
        %v1056 = vand.u32 %v1055, 4294901760
        %v1057 = vsub.f32 %v1055, %v1056
        %v1058 = vand.u32 %v1057, 4294901760
        %1059 = vmatmul.f32.gmra.mxu0 %v1058
        %v1060 = vpop.f32.mrf.mxu0
        %v1061 = vadd.f32 0.0, %v1060
        %1062 = vdwg.mxu0
        %1063 = vmatpush.msra.mxu0 0.0
        %1064 = vmatpush.msra.mxu0 0.0
        %1065 = vmatpush.msra.mxu0 0.0
        %1066 = vmatpush.msra.mxu0 0.0
        %1067 = vmatpush.msra.mxu0 0.0
        %1068 = vmatpush.msra.mxu0 0.0
        %1069 = vmatpush.msra.mxu0 0.0
        %1070 = vmatpush.msra.mxu0 0.0
        %v1071 = vand.u32 %v713, 4294901760
        %v1072 = vsub.f32 %v713, %v1071
        %v1073 = vand.u32 %v1072, 4294901760
        %v1074 = vsub.f32 %v1072, %v1073
        %v1075 = vand.u32 %v1074, 4294901760
        %1076 = vmatpush.msra.mxu0 %v1075
        %v1077 = vand.u32 %v699, 4294901760
        %v1078 = vsub.f32 %v699, %v1077
        %v1079 = vand.u32 %v1078, 4294901760
        %v1080 = vsub.f32 %v1078, %v1079
        %v1081 = vand.u32 %v1080, 4294901760
        %1082 = vmatpush.msra.mxu0 %v1081
        %v1083 = vand.u32 %v697, 4294901760
        %v1084 = vsub.f32 %v697, %v1083
        %v1085 = vand.u32 %v1084, 4294901760
        %v1086 = vsub.f32 %v1084, %v1085
        %v1087 = vand.u32 %v1086, 4294901760
        %1088 = vmatpush.msra.mxu0 %v1087
        %v1089 = vand.u32 %v695, 4294901760
        %v1090 = vsub.f32 %v695, %v1089
        %v1091 = vand.u32 %v1090, 4294901760
        %v1092 = vsub.f32 %v1090, %v1091
        %v1093 = vand.u32 %v1092, 4294901760
        %1094 = vmatpush.msra.mxu0 %v1093
        %v1095 = vand.u32 %v693, 4294901760
        %v1096 = vsub.f32 %v693, %v1095
        %v1097 = vand.u32 %v1096, 4294901760
        %v1098 = vsub.f32 %v1096, %v1097
        %v1099 = vand.u32 %v1098, 4294901760
        %1100 = vmatpush.msra.mxu0 %v1099
        %v1101 = vand.u32 %v691, 4294901760
        %v1102 = vsub.f32 %v691, %v1101
        %v1103 = vand.u32 %v1102, 4294901760
        %v1104 = vsub.f32 %v1102, %v1103
        %v1105 = vand.u32 %v1104, 4294901760
        %1106 = vmatpush.msra.mxu0 %v1105
        %v1107 = vand.u32 %v689, 4294901760
        %v1108 = vsub.f32 %v689, %v1107
        %v1109 = vand.u32 %v1108, 4294901760
        %v1110 = vsub.f32 %v1108, %v1109
        %v1111 = vand.u32 %v1110, 4294901760
        %1112 = vmatpush.msra.mxu0 %v1111
        %v1113 = vand.u32 %v464, 4294901760
        %v1114 = vsub.f32 %v464, %v1113
        %v1115 = vand.u32 %v1114, 4294901760
        %v1116 = vsub.f32 %v1114, %v1115
        %v1117 = vand.u32 %v1116, 4294901760
        %1118 = vmatpush.msra.mxu0 %v1117
        %v1119 = vand.u32 %v702, 4294901760
        %1120 = vmatmul.f32.gmra.mxu0 %v1119
        %v1121 = vpop.f32.mrf.mxu0
        %v1122 = vadd.f32 %v1045, %v1121
        %v1123 = vand.u32 %v705, 4294901760
        %1124 = vmatmul.f32.gmra.mxu0 %v1123
        %v1125 = vpop.f32.mrf.mxu0
        %v1126 = vadd.f32 %v1053, %v1125
        %v1127 = vand.u32 %v708, 4294901760
        %1128 = vmatmul.f32.gmra.mxu0 %v1127
        %v1129 = vpop.f32.mrf.mxu0
        %v1130 = vadd.f32 %v1061, %v1129
        %1131 = vdwg.mxu0
        %1132 = vmatpush.msra.mxu0 0.0
        %1133 = vmatpush.msra.mxu0 0.0
        %1134 = vmatpush.msra.mxu0 0.0
        %1135 = vmatpush.msra.mxu0 0.0
        %1136 = vmatpush.msra.mxu0 0.0
        %1137 = vmatpush.msra.mxu0 0.0
        %1138 = vmatpush.msra.mxu0 0.0
        %1139 = vmatpush.msra.mxu0 0.0
        %v1140 = vand.u32 %v713, 4294901760
        %v1141 = vsub.f32 %v713, %v1140
        %1142 = vmatpush.msra.mxu0 %v1141
        %v1143 = vand.u32 %v699, 4294901760
        %v1144 = vsub.f32 %v699, %v1143
        %1145 = vmatpush.msra.mxu0 %v1144
        %v1146 = vand.u32 %v697, 4294901760
        %v1147 = vsub.f32 %v697, %v1146
        %1148 = vmatpush.msra.mxu0 %v1147
        %v1149 = vand.u32 %v695, 4294901760
        %v1150 = vsub.f32 %v695, %v1149
        %1151 = vmatpush.msra.mxu0 %v1150
        %v1152 = vand.u32 %v693, 4294901760
        %v1153 = vsub.f32 %v693, %v1152
        %1154 = vmatpush.msra.mxu0 %v1153
        %v1155 = vand.u32 %v691, 4294901760
        %v1156 = vsub.f32 %v691, %v1155
        %1157 = vmatpush.msra.mxu0 %v1156
        %v1158 = vand.u32 %v689, 4294901760
        %v1159 = vsub.f32 %v689, %v1158
        %1160 = vmatpush.msra.mxu0 %v1159
        %v1161 = vand.u32 %v464, 4294901760
        %v1162 = vsub.f32 %v464, %v1161
        %1163 = vmatpush.msra.mxu0 %v1162
        %v1164 = vand.u32 %v702, 4294901760
        %v1165 = vsub.f32 %v702, %v1164
        %1166 = vmatmul.f32.gmra.mxu0 %v1165
        %v1167 = vpop.f32.mrf.mxu0
        %v1168 = vadd.f32 %v1122, %v1167
        %v1169 = vand.u32 %v705, 4294901760
        %v1170 = vsub.f32 %v705, %v1169
        %1171 = vmatmul.f32.gmra.mxu0 %v1170
        %v1172 = vpop.f32.mrf.mxu0
        %v1173 = vadd.f32 %v1126, %v1172
        %v1174 = vand.u32 %v708, 4294901760
        %v1175 = vsub.f32 %v708, %v1174
        %1176 = vmatmul.f32.gmra.mxu0 %v1175
        %v1177 = vpop.f32.mrf.mxu0
        %v1178 = vadd.f32 %v1130, %v1177
        %1179 = vdwg.mxu0
        %1180 = vmatpush.msra.mxu0 0.0
        %1181 = vmatpush.msra.mxu0 0.0
        %1182 = vmatpush.msra.mxu0 0.0
        %1183 = vmatpush.msra.mxu0 0.0
        %1184 = vmatpush.msra.mxu0 0.0
        %1185 = vmatpush.msra.mxu0 0.0
        %1186 = vmatpush.msra.mxu0 0.0
        %1187 = vmatpush.msra.mxu0 0.0
        %v1188 = vand.u32 %v713, 4294901760
        %1189 = vmatpush.msra.mxu0 %v1188
        %v1190 = vand.u32 %v699, 4294901760
        %1191 = vmatpush.msra.mxu0 %v1190
        %v1192 = vand.u32 %v697, 4294901760
        %1193 = vmatpush.msra.mxu0 %v1192
        %v1194 = vand.u32 %v695, 4294901760
        %1195 = vmatpush.msra.mxu0 %v1194
        %v1196 = vand.u32 %v693, 4294901760
        %1197 = vmatpush.msra.mxu0 %v1196
        %v1198 = vand.u32 %v691, 4294901760
        %1199 = vmatpush.msra.mxu0 %v1198
        %v1200 = vand.u32 %v689, 4294901760
        %1201 = vmatpush.msra.mxu0 %v1200
        %v1202 = vand.u32 %v464, 4294901760
        %1203 = vmatpush.msra.mxu0 %v1202
        %v1204 = vand.u32 %v702, 4294901760
        %v1205 = vsub.f32 %v702, %v1204
        %v1206 = vand.u32 %v1205, 4294901760
        %1207 = vmatmul.f32.gmra.mxu0 %v1206
        %v1208 = vpop.f32.mrf.mxu0
        %v1209 = vadd.f32 %v1168, %v1208
        %v1210 = vand.u32 %v705, 4294901760
        %v1211 = vsub.f32 %v705, %v1210
        %v1212 = vand.u32 %v1211, 4294901760
        %1213 = vmatmul.f32.gmra.mxu0 %v1212
        %v1214 = vpop.f32.mrf.mxu0
        %v1215 = vadd.f32 %v1173, %v1214
        %v1216 = vand.u32 %v708, 4294901760
        %v1217 = vsub.f32 %v708, %v1216
        %v1218 = vand.u32 %v1217, 4294901760
        %1219 = vmatmul.f32.gmra.mxu0 %v1218
        %v1220 = vpop.f32.mrf.mxu0
        %v1221 = vadd.f32 %v1178, %v1220
        %1222 = vdwg.mxu0
        %1223 = vmatpush.msra.mxu0 0.0
        %1224 = vmatpush.msra.mxu0 0.0
        %1225 = vmatpush.msra.mxu0 0.0
        %1226 = vmatpush.msra.mxu0 0.0
        %1227 = vmatpush.msra.mxu0 0.0
        %1228 = vmatpush.msra.mxu0 0.0
        %1229 = vmatpush.msra.mxu0 0.0
        %1230 = vmatpush.msra.mxu0 0.0
        %v1231 = vand.u32 %v713, 4294901760
        %v1232 = vsub.f32 %v713, %v1231
        %v1233 = vand.u32 %v1232, 4294901760
        %1234 = vmatpush.msra.mxu0 %v1233
        %v1235 = vand.u32 %v699, 4294901760
        %v1236 = vsub.f32 %v699, %v1235
        %v1237 = vand.u32 %v1236, 4294901760
        %1238 = vmatpush.msra.mxu0 %v1237
        %v1239 = vand.u32 %v697, 4294901760
        %v1240 = vsub.f32 %v697, %v1239
        %v1241 = vand.u32 %v1240, 4294901760
        %1242 = vmatpush.msra.mxu0 %v1241
        %v1243 = vand.u32 %v695, 4294901760
        %v1244 = vsub.f32 %v695, %v1243
        %v1245 = vand.u32 %v1244, 4294901760
        %1246 = vmatpush.msra.mxu0 %v1245
        %v1247 = vand.u32 %v693, 4294901760
        %v1248 = vsub.f32 %v693, %v1247
        %v1249 = vand.u32 %v1248, 4294901760
        %1250 = vmatpush.msra.mxu0 %v1249
        %v1251 = vand.u32 %v691, 4294901760
        %v1252 = vsub.f32 %v691, %v1251
        %v1253 = vand.u32 %v1252, 4294901760
        %1254 = vmatpush.msra.mxu0 %v1253
        %v1255 = vand.u32 %v689, 4294901760
        %v1256 = vsub.f32 %v689, %v1255
        %v1257 = vand.u32 %v1256, 4294901760
        %1258 = vmatpush.msra.mxu0 %v1257
        %v1259 = vand.u32 %v464, 4294901760
        %v1260 = vsub.f32 %v464, %v1259
        %v1261 = vand.u32 %v1260, 4294901760
        %1262 = vmatpush.msra.mxu0 %v1261
        %v1263 = vand.u32 %v702, 4294901760
        %1264 = vmatmul.f32.gmra.mxu0 %v1263
        %v1265 = vpop.f32.mrf.mxu0
        %v1266 = vadd.f32 %v1209, %v1265
        %v1267 = vand.u32 %v705, 4294901760
        %1268 = vmatmul.f32.gmra.mxu0 %v1267
        %v1269 = vpop.f32.mrf.mxu0
        %v1270 = vadd.f32 %v1215, %v1269
        %v1271 = vand.u32 %v708, 4294901760
        %1272 = vmatmul.f32.gmra.mxu0 %v1271
        %v1273 = vpop.f32.mrf.mxu0
        %v1274 = vadd.f32 %v1221, %v1273
        %1275 = vdwg.mxu0
        %1276 = vmatpush.msra.mxu0 0.0
        %1277 = vmatpush.msra.mxu0 0.0
        %1278 = vmatpush.msra.mxu0 0.0
        %1279 = vmatpush.msra.mxu0 0.0
        %1280 = vmatpush.msra.mxu0 0.0
        %1281 = vmatpush.msra.mxu0 0.0
        %1282 = vmatpush.msra.mxu0 0.0
        %1283 = vmatpush.msra.mxu0 0.0
        %v1284 = vand.u32 %v713, 4294901760
        %1285 = vmatpush.msra.mxu0 %v1284
        %v1286 = vand.u32 %v699, 4294901760
        %1287 = vmatpush.msra.mxu0 %v1286
        %v1288 = vand.u32 %v697, 4294901760
        %1289 = vmatpush.msra.mxu0 %v1288
        %v1290 = vand.u32 %v695, 4294901760
        %1291 = vmatpush.msra.mxu0 %v1290
        %v1292 = vand.u32 %v693, 4294901760
        %1293 = vmatpush.msra.mxu0 %v1292
        %v1294 = vand.u32 %v691, 4294901760
        %1295 = vmatpush.msra.mxu0 %v1294
        %v1296 = vand.u32 %v689, 4294901760
        %1297 = vmatpush.msra.mxu0 %v1296
        %v1298 = vand.u32 %v464, 4294901760
        %1299 = vmatpush.msra.mxu0 %v1298
        %v1300 = vand.u32 %v702, 4294901760
        %1301 = vmatmul.f32.gmra.mxu0 %v1300
        %v1302 = vpop.f32.mrf.mxu0
        %v1303 = vadd.f32 %v1266, %v1302
        %v1304 = vand.u32 %v705, 4294901760
        %1305 = vmatmul.f32.gmra.mxu0 %v1304
        %v1306 = vpop.f32.mrf.mxu0
        %v1307 = vadd.f32 %v1270, %v1306
        %v1308 = vand.u32 %v708, 4294901760
        %1309 = vmatmul.f32.gmra.mxu0 %v1308
        %v1310 = vpop.f32.mrf.mxu0
        %v1311 = vadd.f32 %v1274, %v1310
        %1312 = vdwg.mxu0
        %1313 = vrot.lane.b32.xlu0 %v1004, 48
        %v1314 = vpop.permute.xlu0 %1313
        %1315 = vrot.lane.b32.xlu0 %v1303, 48
        %v1316 = vpop.permute.xlu0 %1315
        %vm1317 = vcmp.lt.s32.totalorder %v446, 48
        %v1318 = vsel %vm1317, %v1314, %v1316
        %v1319 = vsel %vm1317, %v1316, %v1314
        %v1320 = vperm.slane %v456, 1
        %v1321 = vperm.slane %v456, 3
        %v1322 = vperm.slane %v1320, 1
        %v1323 = vperm.slane %v1321, 1
        %vm1324 = vcmp.eq.s32.totalorder %v1322, 1
        %vm1325 = vcmp.eq.s32.totalorder %v1323, 1
        %v1326 = vsel %vm1324, %v1319, 0.0
        %v1327 = vsel %vm1325, %v1318, 0.0
        %v1330 = vrot.slane %v1004, 3
        %v1331 = vrot.slane %v1303, 3
        %1334 = vrot.lane.b32.xlu0 %v1330, 32
        %v1335 = vpop.permute.xlu0 %1334
        %1336 = vrot.lane.b32.xlu0 %v1331, 32
        %v1337 = vpop.permute.xlu0 %1336
        %vm1338 = vcmp.lt.s32.totalorder %v446, 32
        %v1339 = vsel %vm1338, %v1335, %v1337
        %v1340 = vsel %vm1338, %v1337, %v1335
        %v1341 = vperm.slane %v484, 1
        %v1342 = vperm.slane %v484, 3
        %v1343 = vperm.slane %v1341, 1
        %v1344 = vperm.slane %v1342, 1
        %vm1345 = vcmp.eq.s32.totalorder %v1343, 1
        %vm1346 = vcmp.eq.s32.totalorder %v1344, 1
        %v1347 = vsel %vm1345, %v1340, 0.0
        %v1348 = vsel %vm1346, %v1339, 0.0
        %v1349 = vadd.f32 %v1326, %v1347
        %v1350 = vadd.f32 %v1327, %v1348
        %v1353 = vrot.slane %v1004, 6
        %v1354 = vrot.slane %v1008, 6
        %v1355 = vsel %vm411, %v1353, %v1354
        %v1356 = vrot.slane %v1303, 6
        %v1357 = vrot.slane %v1307, 6
        %v1358 = vsel %vm411, %v1356, %v1357
        %1361 = vrot.lane.b32.xlu0 %v1355, 16
        %v1362 = vpop.permute.xlu0 %1361
        %1363 = vrot.lane.b32.xlu0 %v1358, 16
        %v1364 = vpop.permute.xlu0 %1363
        %vm1365 = vcmp.lt.s32.totalorder %v446, 16
        %v1366 = vsel %vm1365, %v1362, %v1364
        %v1367 = vsel %vm1365, %v1364, %v1362
        %v1368 = vperm.slane %v512, 1
        %v1369 = vperm.slane %v512, 3
        %v1370 = vperm.slane %v1368, 1
        %v1371 = vperm.slane %v1369, 1
        %vm1372 = vcmp.eq.s32.totalorder %v1370, 1
        %vm1373 = vcmp.eq.s32.totalorder %v1371, 1
        %v1374 = vsel %vm1372, %v1367, 0.0
        %v1375 = vsel %vm1373, %v1366, 0.0
        %v1376 = vadd.f32 %v1349, %v1374
        %v1377 = vadd.f32 %v1350, %v1375
        %v1378 = vrot.slane %v1008, 1
        %v1379 = vrot.slane %v1307, 1
        %v1382 = vadd.f32 %v1376, %v1378
        %v1383 = vadd.f32 %v1377, %v1379
        %v1384 = vrot.slane %v1008, 4
        %v1385 = vrot.slane %v1307, 4
        %1388 = vrot.lane.b32.xlu0 %v1384, 112
        %v1389 = vpop.permute.xlu0 %1388
        %1390 = vrot.lane.b32.xlu0 %v1385, 112
        %v1391 = vpop.permute.xlu0 %1390
        %vm1392 = vcmp.lt.s32.totalorder %v446, 112
        %v1393 = vsel %vm1392, %v1389, %v1391
        %v1394 = vsel %vm1392, %v1391, %v1389
        %v1395 = vperm.slane %v540, 1
        %v1396 = vperm.slane %v540, 3
        %v1397 = vperm.slane %v1395, 1
        %v1398 = vperm.slane %v1396, 1
        %vm1399 = vcmp.eq.s32.totalorder %v1397, 1
        %vm1400 = vcmp.eq.s32.totalorder %v1398, 1
        %v1401 = vsel %vm1399, %v1393, 0.0
        %v1402 = vsel %vm1400, %v1394, 0.0
        %v1403 = vadd.f32 %v1382, %v1401
        %v1404 = vadd.f32 %v1383, %v1402
        %v1407 = vrot.slane %v1008, 7
        %v1408 = vrot.slane %v1012, 7
        %v1409 = vsel %vm408, %v1407, %v1408
        %v1410 = vrot.slane %v1307, 7
        %v1411 = vrot.slane %v1311, 7
        %v1412 = vsel %vm408, %v1410, %v1411
        %1415 = vrot.lane.b32.xlu0 %v1409, 96
        %v1416 = vpop.permute.xlu0 %1415
        %1417 = vrot.lane.b32.xlu0 %v1412, 96
        %v1418 = vpop.permute.xlu0 %1417
        %vm1419 = vcmp.lt.s32.totalorder %v446, 96
        %v1420 = vsel %vm1419, %v1416, %v1418
        %v1421 = vsel %vm1419, %v1418, %v1416
        %v1422 = vperm.slane %v568, 1
        %v1423 = vperm.slane %v568, 3
        %v1424 = vperm.slane %v1422, 1
        %v1425 = vperm.slane %v1423, 1
        %vm1426 = vcmp.eq.s32.totalorder %v1424, 1
        %vm1427 = vcmp.eq.s32.totalorder %v1425, 1
        %v1428 = vsel %vm1426, %v1420, 0.0
        %v1429 = vsel %vm1427, %v1421, 0.0
        %v1430 = vadd.f32 %v1403, %v1428
        %v1431 = vadd.f32 %v1404, %v1429
        %v1432 = vrot.slane %v1012, 2
        %v1433 = vrot.slane %v1311, 2
        %1436 = vrot.lane.b32.xlu0 %v1432, 80
        %v1437 = vpop.permute.xlu0 %1436
        %1438 = vrot.lane.b32.xlu0 %v1433, 80
        %v1439 = vpop.permute.xlu0 %1438
        %vm1440 = vcmp.lt.s32.totalorder %v446, 80
        %v1441 = vsel %vm1440, %v1437, %v1439
        %v1442 = vsel %vm1440, %v1439, %v1437
        %v1443 = vperm.slane %v596, 1
        %v1444 = vperm.slane %v596, 3
        %v1445 = vperm.slane %v1443, 1
        %v1446 = vperm.slane %v1444, 1
        %vm1447 = vcmp.eq.s32.totalorder %v1445, 1
        %vm1448 = vcmp.eq.s32.totalorder %v1446, 1
        %v1449 = vsel %vm1447, %v1441, 0.0
        %v1450 = vsel %vm1448, %v1442, 0.0
        %v1451 = vadd.f32 %v1430, %v1449
        %v1452 = vadd.f32 %v1431, %v1450
        %v1453 = vxor.u32 %v1451, 2147483648
        %v1454 = vxor.u32 %v1452, 2147483648
        %v1455 = vmul.f32 %v1453, 1.442695
        %v1456 = vpow.pop %v1455
        %v1457 = vmul.f32 %v1454, 1.442695
        %v1458 = vpow.pop %v1457
        %v1459 = vadd.f32 %v1456, 1.0
        %v1460 = vadd.f32 %v1458, 1.0
        %v1461 = vrcp.pop %v1459
        %v1462 = vmul.f32 %v1459, %v1461
        %v1463 = vsub.f32 1.0, %v1462
        %v1464 = vmul.f32 %v1461, %v1463
        %v1465 = vadd.f32 %v1461, %v1464
        %vm1466 = vweird.f32 %v1459
        %vm1467 = vweird.f32 %v1461
        %vm1468 = vmor %vm1466, %vm1467
        %v1469 = vsel %vm1468, %v1461, %v1465
        %v1470 = vand.u32 2147483647, %v1459
        %vm1471 = vcmp.eq.f32.partialorder %v1470, 8.507059e+37
        %v1472 = vand.u32 %v1459, 2147483648
        %v1473 = vor.u32 1.1754944e-38, %v1472
        %v1474 = vsel %vm1471, %v1473, %v1469
        %v1475 = vmul.f32 1.0, %v1474
        %v1476 = vrcp.pop %v1460
        %v1477 = vmul.f32 %v1460, %v1476
        %v1478 = vsub.f32 1.0, %v1477
        %v1479 = vmul.f32 %v1476, %v1478
        %v1480 = vadd.f32 %v1476, %v1479
        %vm1481 = vweird.f32 %v1460
        %vm1482 = vweird.f32 %v1476
        %vm1483 = vmor %vm1481, %vm1482
        %v1484 = vsel %vm1483, %v1476, %v1480
        %v1485 = vand.u32 2147483647, %v1460
        %vm1486 = vcmp.eq.f32.partialorder %v1485, 8.507059e+37
        %v1487 = vand.u32 %v1460, 2147483648
        %v1488 = vor.u32 1.1754944e-38, %v1487
        %v1489 = vsel %vm1486, %v1488, %v1484
        %v1490 = vmul.f32 1.0, %v1489
        %v1491 = vmul.f32 %v414, %v1475
        %v1492 = vmul.f32 %v415, %v1490
        %v1493 = vmul.f32 %v1491, %v1491
        %v1494 = vmul.f32 %v1492, %v1492
        %1495 = vst [vmem:[#allocation1] ss:$2 sm:$0xff] %v270
        %v1496 = vld.sshfl [vmem:[#allocation1] sm:$0xff pattern:$0x75316420]
        %v1497 = vld.sshfl [vmem:[#allocation1 + $0x8] sm:$0xff pattern:$0x75316420]
        %1500 = vmatpush.xpose.msra.mxu0 0.0
        %1501 = vmatpush.xpose.msra.mxu0 0.0
        %1502 = vmatpush.xpose.msra.mxu0 0.0
        %1503 = vmatpush.xpose.msra.mxu0 0.0
        %1504 = vmatpush.xpose.msra.mxu0 0.0
        %1505 = vmatpush.xpose.msra.mxu0 0.0
        %1506 = vmatpush.xpose.msra.mxu0 0.0
        %1507 = vmatpush.xpose.msra.mxu0 0.0
        %1508 = vmatpush.xpose.msra.mxu0 0.0
        %1509 = vmatpush.xpose.msra.mxu0 0.0
        %1510 = vmatpush.xpose.msra.mxu0 0.0
        %1511 = vmatpush.xpose.msra.mxu0 0.0
        %1512 = vmatpush.xpose.msra.mxu0 0.0
        %1513 = vmatpush.xpose.msra.mxu0 0.0
        %1514 = vmatpush.xpose.msra.mxu0 0.0
        %v1515 = vand.u32 %v1491, 4294901760
        %1516 = vmatpush.xpose.msra.mxu0 %v1515
        %v1517 = vand.u32 %v1496, 4294901760
        %v1518 = vsub.f32 %v1496, %v1517
        %v1519 = vand.u32 %v1518, 4294901760
        %v1520 = vsub.f32 %v1518, %v1519
        %v1521 = vand.u32 %v1520, 4294901760
        %1522 = vmatmul.f32.gmra.mxu0 %v1521
        %v1523 = vpop.f32.mrf.mxu0
        %v1524 = vadd.f32 0.0, %v1523
        %1525 = vdwg.mxu0
        %1526 = vmatpush.xpose.msra.mxu0 0.0
        %1527 = vmatpush.xpose.msra.mxu0 0.0
        %1528 = vmatpush.xpose.msra.mxu0 0.0
        %1529 = vmatpush.xpose.msra.mxu0 0.0
        %1530 = vmatpush.xpose.msra.mxu0 0.0
        %1531 = vmatpush.xpose.msra.mxu0 0.0
        %1532 = vmatpush.xpose.msra.mxu0 0.0
        %1533 = vmatpush.xpose.msra.mxu0 0.0
        %1534 = vmatpush.xpose.msra.mxu0 0.0
        %1535 = vmatpush.xpose.msra.mxu0 0.0
        %1536 = vmatpush.xpose.msra.mxu0 0.0
        %1537 = vmatpush.xpose.msra.mxu0 0.0
        %1538 = vmatpush.xpose.msra.mxu0 0.0
        %1539 = vmatpush.xpose.msra.mxu0 0.0
        %1540 = vmatpush.xpose.msra.mxu0 0.0
        %v1541 = vand.u32 %v1491, 4294901760
        %v1542 = vsub.f32 %v1491, %v1541
        %v1543 = vand.u32 %v1542, 4294901760
        %v1544 = vsub.f32 %v1542, %v1543
        %v1545 = vand.u32 %v1544, 4294901760
        %1546 = vmatpush.xpose.msra.mxu0 %v1545
        %v1547 = vand.u32 %v1496, 4294901760
        %1548 = vmatmul.f32.gmra.mxu0 %v1547
        %v1549 = vpop.f32.mrf.mxu0
        %v1550 = vadd.f32 %v1524, %v1549
        %1551 = vdwg.mxu0
        %1552 = vmatpush.xpose.msra.mxu0 0.0
        %1553 = vmatpush.xpose.msra.mxu0 0.0
        %1554 = vmatpush.xpose.msra.mxu0 0.0
        %1555 = vmatpush.xpose.msra.mxu0 0.0
        %1556 = vmatpush.xpose.msra.mxu0 0.0
        %1557 = vmatpush.xpose.msra.mxu0 0.0
        %1558 = vmatpush.xpose.msra.mxu0 0.0
        %1559 = vmatpush.xpose.msra.mxu0 0.0
        %1560 = vmatpush.xpose.msra.mxu0 0.0
        %1561 = vmatpush.xpose.msra.mxu0 0.0
        %1562 = vmatpush.xpose.msra.mxu0 0.0
        %1563 = vmatpush.xpose.msra.mxu0 0.0
        %1564 = vmatpush.xpose.msra.mxu0 0.0
        %1565 = vmatpush.xpose.msra.mxu0 0.0
        %1566 = vmatpush.xpose.msra.mxu0 0.0
        %v1567 = vand.u32 %v1491, 4294901760
        %v1568 = vsub.f32 %v1491, %v1567
        %1569 = vmatpush.xpose.msra.mxu0 %v1568
        %v1570 = vand.u32 %v1496, 4294901760
        %v1571 = vsub.f32 %v1496, %v1570
        %1572 = vmatmul.f32.gmra.mxu0 %v1571
        %v1573 = vpop.f32.mrf.mxu0
        %v1574 = vadd.f32 %v1550, %v1573
        %1575 = vdwg.mxu0
        %1576 = vmatpush.xpose.msra.mxu0 0.0
        %1577 = vmatpush.xpose.msra.mxu0 0.0
        %1578 = vmatpush.xpose.msra.mxu0 0.0
        %1579 = vmatpush.xpose.msra.mxu0 0.0
        %1580 = vmatpush.xpose.msra.mxu0 0.0
        %1581 = vmatpush.xpose.msra.mxu0 0.0
        %1582 = vmatpush.xpose.msra.mxu0 0.0
        %1583 = vmatpush.xpose.msra.mxu0 0.0
        %1584 = vmatpush.xpose.msra.mxu0 0.0
        %1585 = vmatpush.xpose.msra.mxu0 0.0
        %1586 = vmatpush.xpose.msra.mxu0 0.0
        %1587 = vmatpush.xpose.msra.mxu0 0.0
        %1588 = vmatpush.xpose.msra.mxu0 0.0
        %1589 = vmatpush.xpose.msra.mxu0 0.0
        %1590 = vmatpush.xpose.msra.mxu0 0.0
        %v1591 = vand.u32 %v1491, 4294901760
        %1592 = vmatpush.xpose.msra.mxu0 %v1591
        %v1593 = vand.u32 %v1496, 4294901760
        %v1594 = vsub.f32 %v1496, %v1593
        %v1595 = vand.u32 %v1594, 4294901760
        %1596 = vmatmul.f32.gmra.mxu0 %v1595
        %v1597 = vpop.f32.mrf.mxu0
        %v1598 = vadd.f32 %v1574, %v1597
        %1599 = vdwg.mxu0
        %1600 = vmatpush.xpose.msra.mxu0 0.0
        %1601 = vmatpush.xpose.msra.mxu0 0.0
        %1602 = vmatpush.xpose.msra.mxu0 0.0
        %1603 = vmatpush.xpose.msra.mxu0 0.0
        %1604 = vmatpush.xpose.msra.mxu0 0.0
        %1605 = vmatpush.xpose.msra.mxu0 0.0
        %1606 = vmatpush.xpose.msra.mxu0 0.0
        %1607 = vmatpush.xpose.msra.mxu0 0.0
        %1608 = vmatpush.xpose.msra.mxu0 0.0
        %1609 = vmatpush.xpose.msra.mxu0 0.0
        %1610 = vmatpush.xpose.msra.mxu0 0.0
        %1611 = vmatpush.xpose.msra.mxu0 0.0
        %1612 = vmatpush.xpose.msra.mxu0 0.0
        %1613 = vmatpush.xpose.msra.mxu0 0.0
        %1614 = vmatpush.xpose.msra.mxu0 0.0
        %v1615 = vand.u32 %v1491, 4294901760
        %v1616 = vsub.f32 %v1491, %v1615
        %v1617 = vand.u32 %v1616, 4294901760
        %1618 = vmatpush.xpose.msra.mxu0 %v1617
        %v1619 = vand.u32 %v1496, 4294901760
        %1620 = vmatmul.f32.gmra.mxu0 %v1619
        %v1621 = vpop.f32.mrf.mxu0
        %v1622 = vadd.f32 %v1598, %v1621
        %1623 = vdwg.mxu0
        %1624 = vmatpush.xpose.msra.mxu0 0.0
        %1625 = vmatpush.xpose.msra.mxu0 0.0
        %1626 = vmatpush.xpose.msra.mxu0 0.0
        %1627 = vmatpush.xpose.msra.mxu0 0.0
        %1628 = vmatpush.xpose.msra.mxu0 0.0
        %1629 = vmatpush.xpose.msra.mxu0 0.0
        %1630 = vmatpush.xpose.msra.mxu0 0.0
        %1631 = vmatpush.xpose.msra.mxu0 0.0
        %1632 = vmatpush.xpose.msra.mxu0 0.0
        %1633 = vmatpush.xpose.msra.mxu0 0.0
        %1634 = vmatpush.xpose.msra.mxu0 0.0
        %1635 = vmatpush.xpose.msra.mxu0 0.0
        %1636 = vmatpush.xpose.msra.mxu0 0.0
        %1637 = vmatpush.xpose.msra.mxu0 0.0
        %1638 = vmatpush.xpose.msra.mxu0 0.0
        %v1639 = vand.u32 %v1491, 4294901760
        %1640 = vmatpush.xpose.msra.mxu0 %v1639
        %v1641 = vand.u32 %v1496, 4294901760
        %1642 = vmatmul.f32.gmra.mxu0 %v1641
        %v1643 = vpop.f32.mrf.mxu0
        %v1644 = vadd.f32 %v1622, %v1643
        %1645 = vdwg.mxu0
        %1646 = vmatpush.xpose.msra.mxu0 0.0
        %1647 = vmatpush.xpose.msra.mxu0 0.0
        %1648 = vmatpush.xpose.msra.mxu0 0.0
        %1649 = vmatpush.xpose.msra.mxu0 0.0
        %1650 = vmatpush.xpose.msra.mxu0 0.0
        %1651 = vmatpush.xpose.msra.mxu0 0.0
        %1652 = vmatpush.xpose.msra.mxu0 0.0
        %1653 = vmatpush.xpose.msra.mxu0 0.0
        %1654 = vmatpush.xpose.msra.mxu0 0.0
        %1655 = vmatpush.xpose.msra.mxu0 0.0
        %1656 = vmatpush.xpose.msra.mxu0 0.0
        %1657 = vmatpush.xpose.msra.mxu0 0.0
        %1658 = vmatpush.xpose.msra.mxu0 0.0
        %1659 = vmatpush.xpose.msra.mxu0 0.0
        %1660 = vmatpush.xpose.msra.mxu0 0.0
        %v1661 = vand.u32 %v1492, 4294901760
        %1662 = vmatpush.xpose.msra.mxu0 %v1661
        %v1663 = vand.u32 %v1497, 4294901760
        %v1664 = vsub.f32 %v1497, %v1663
        %v1665 = vand.u32 %v1664, 4294901760
        %v1666 = vsub.f32 %v1664, %v1665
        %v1667 = vand.u32 %v1666, 4294901760
        %1668 = vmatmul.f32.gmra.mxu0 %v1667
        %v1669 = vpop.f32.mrf.mxu0
        %v1670 = vadd.f32 %v1644, %v1669
        %1671 = vdwg.mxu0
        %1672 = vmatpush.xpose.msra.mxu0 0.0
        %1673 = vmatpush.xpose.msra.mxu0 0.0
        %1674 = vmatpush.xpose.msra.mxu0 0.0
        %1675 = vmatpush.xpose.msra.mxu0 0.0
        %1676 = vmatpush.xpose.msra.mxu0 0.0
        %1677 = vmatpush.xpose.msra.mxu0 0.0
        %1678 = vmatpush.xpose.msra.mxu0 0.0
        %1679 = vmatpush.xpose.msra.mxu0 0.0
        %1680 = vmatpush.xpose.msra.mxu0 0.0
        %1681 = vmatpush.xpose.msra.mxu0 0.0
        %1682 = vmatpush.xpose.msra.mxu0 0.0
        %1683 = vmatpush.xpose.msra.mxu0 0.0
        %1684 = vmatpush.xpose.msra.mxu0 0.0
        %1685 = vmatpush.xpose.msra.mxu0 0.0
        %1686 = vmatpush.xpose.msra.mxu0 0.0
        %v1687 = vand.u32 %v1492, 4294901760
        %v1688 = vsub.f32 %v1492, %v1687
        %v1689 = vand.u32 %v1688, 4294901760
        %v1690 = vsub.f32 %v1688, %v1689
        %v1691 = vand.u32 %v1690, 4294901760
        %1692 = vmatpush.xpose.msra.mxu0 %v1691
        %v1693 = vand.u32 %v1497, 4294901760
        %1694 = vmatmul.f32.gmra.mxu0 %v1693
        %v1695 = vpop.f32.mrf.mxu0
        %v1696 = vadd.f32 %v1670, %v1695
        %1697 = vdwg.mxu0
        %1698 = vmatpush.xpose.msra.mxu0 0.0
        %1699 = vmatpush.xpose.msra.mxu0 0.0
        %1700 = vmatpush.xpose.msra.mxu0 0.0
        %1701 = vmatpush.xpose.msra.mxu0 0.0
        %1702 = vmatpush.xpose.msra.mxu0 0.0
        %1703 = vmatpush.xpose.msra.mxu0 0.0
        %1704 = vmatpush.xpose.msra.mxu0 0.0
        %1705 = vmatpush.xpose.msra.mxu0 0.0
        %1706 = vmatpush.xpose.msra.mxu0 0.0
        %1707 = vmatpush.xpose.msra.mxu0 0.0
        %1708 = vmatpush.xpose.msra.mxu0 0.0
        %1709 = vmatpush.xpose.msra.mxu0 0.0
        %1710 = vmatpush.xpose.msra.mxu0 0.0
        %1711 = vmatpush.xpose.msra.mxu0 0.0
        %1712 = vmatpush.xpose.msra.mxu0 0.0
        %v1713 = vand.u32 %v1492, 4294901760
        %v1714 = vsub.f32 %v1492, %v1713
        %1715 = vmatpush.xpose.msra.mxu0 %v1714
        %v1716 = vand.u32 %v1497, 4294901760
        %v1717 = vsub.f32 %v1497, %v1716
        %1718 = vmatmul.f32.gmra.mxu0 %v1717
        %v1719 = vpop.f32.mrf.mxu0
        %v1720 = vadd.f32 %v1696, %v1719
        %1721 = vdwg.mxu0
        %1722 = vmatpush.xpose.msra.mxu0 0.0
        %1723 = vmatpush.xpose.msra.mxu0 0.0
        %1724 = vmatpush.xpose.msra.mxu0 0.0
        %1725 = vmatpush.xpose.msra.mxu0 0.0
        %1726 = vmatpush.xpose.msra.mxu0 0.0
        %1727 = vmatpush.xpose.msra.mxu0 0.0
        %1728 = vmatpush.xpose.msra.mxu0 0.0
        %1729 = vmatpush.xpose.msra.mxu0 0.0
        %1730 = vmatpush.xpose.msra.mxu0 0.0
        %1731 = vmatpush.xpose.msra.mxu0 0.0
        %1732 = vmatpush.xpose.msra.mxu0 0.0
        %1733 = vmatpush.xpose.msra.mxu0 0.0
        %1734 = vmatpush.xpose.msra.mxu0 0.0
        %1735 = vmatpush.xpose.msra.mxu0 0.0
        %1736 = vmatpush.xpose.msra.mxu0 0.0
        %v1737 = vand.u32 %v1492, 4294901760
        %1738 = vmatpush.xpose.msra.mxu0 %v1737
        %v1739 = vand.u32 %v1497, 4294901760
        %v1740 = vsub.f32 %v1497, %v1739
        %v1741 = vand.u32 %v1740, 4294901760
        %1742 = vmatmul.f32.gmra.mxu0 %v1741
        %v1743 = vpop.f32.mrf.mxu0
        %v1744 = vadd.f32 %v1720, %v1743
        %1745 = vdwg.mxu0
        %1746 = vmatpush.xpose.msra.mxu0 0.0
        %1747 = vmatpush.xpose.msra.mxu0 0.0
        %1748 = vmatpush.xpose.msra.mxu0 0.0
        %1749 = vmatpush.xpose.msra.mxu0 0.0
        %1750 = vmatpush.xpose.msra.mxu0 0.0
        %1751 = vmatpush.xpose.msra.mxu0 0.0
        %1752 = vmatpush.xpose.msra.mxu0 0.0
        %1753 = vmatpush.xpose.msra.mxu0 0.0
        %1754 = vmatpush.xpose.msra.mxu0 0.0
        %1755 = vmatpush.xpose.msra.mxu0 0.0
        %1756 = vmatpush.xpose.msra.mxu0 0.0
        %1757 = vmatpush.xpose.msra.mxu0 0.0
        %1758 = vmatpush.xpose.msra.mxu0 0.0
        %1759 = vmatpush.xpose.msra.mxu0 0.0
        %1760 = vmatpush.xpose.msra.mxu0 0.0
        %v1761 = vand.u32 %v1492, 4294901760
        %v1762 = vsub.f32 %v1492, %v1761
        %v1763 = vand.u32 %v1762, 4294901760
        %1764 = vmatpush.xpose.msra.mxu0 %v1763
        %v1765 = vand.u32 %v1497, 4294901760
        %1766 = vmatmul.f32.gmra.mxu0 %v1765
        %v1767 = vpop.f32.mrf.mxu0
        %v1768 = vadd.f32 %v1744, %v1767
        %1769 = vdwg.mxu0
        %1770 = vmatpush.xpose.msra.mxu0 0.0
        %1771 = vmatpush.xpose.msra.mxu0 0.0
        %1772 = vmatpush.xpose.msra.mxu0 0.0
        %1773 = vmatpush.xpose.msra.mxu0 0.0
        %1774 = vmatpush.xpose.msra.mxu0 0.0
        %1775 = vmatpush.xpose.msra.mxu0 0.0
        %1776 = vmatpush.xpose.msra.mxu0 0.0
        %1777 = vmatpush.xpose.msra.mxu0 0.0
        %1778 = vmatpush.xpose.msra.mxu0 0.0
        %1779 = vmatpush.xpose.msra.mxu0 0.0
        %1780 = vmatpush.xpose.msra.mxu0 0.0
        %1781 = vmatpush.xpose.msra.mxu0 0.0
        %1782 = vmatpush.xpose.msra.mxu0 0.0
        %1783 = vmatpush.xpose.msra.mxu0 0.0
        %1784 = vmatpush.xpose.msra.mxu0 0.0
        %v1785 = vand.u32 %v1492, 4294901760
        %1786 = vmatpush.xpose.msra.mxu0 %v1785
        %v1787 = vand.u32 %v1497, 4294901760
        %1788 = vmatmul.f32.gmra.mxu0 %v1787
        %v1789 = vpop.f32.mrf.mxu0
        %v1790 = vadd.f32 %v1768, %v1789
        %1791 = vdwg.mxu0
        %v1792 = vmul.f32 %v1790, 0.00390625
        %1794 = vst [vmem:[#allocation1] ss:$2 sm:$0xff] %v328
        %v1795 = vld.sshfl [vmem:[#allocation1] sm:$0xff pattern:$0x75316420]
        %v1796 = vld.sshfl [vmem:[#allocation1 + $0x8] sm:$0xff pattern:$0x75316420]
        %1799 = vmatpush.xpose.msra.mxu0 0.0
        %1800 = vmatpush.xpose.msra.mxu0 0.0
        %1801 = vmatpush.xpose.msra.mxu0 0.0
        %1802 = vmatpush.xpose.msra.mxu0 0.0
        %1803 = vmatpush.xpose.msra.mxu0 0.0
        %1804 = vmatpush.xpose.msra.mxu0 0.0
        %1805 = vmatpush.xpose.msra.mxu0 0.0
        %1806 = vmatpush.xpose.msra.mxu0 0.0
        %1807 = vmatpush.xpose.msra.mxu0 0.0
        %1808 = vmatpush.xpose.msra.mxu0 0.0
        %1809 = vmatpush.xpose.msra.mxu0 0.0
        %1810 = vmatpush.xpose.msra.mxu0 0.0
        %1811 = vmatpush.xpose.msra.mxu0 0.0
        %1812 = vmatpush.xpose.msra.mxu0 0.0
        %1813 = vmatpush.xpose.msra.mxu0 0.0
        %v1814 = vand.u32 %v1493, 4294901760
        %1815 = vmatpush.xpose.msra.mxu0 %v1814
        %v1816 = vand.u32 %v1795, 4294901760
        %v1817 = vsub.f32 %v1795, %v1816
        %v1818 = vand.u32 %v1817, 4294901760
        %v1819 = vsub.f32 %v1817, %v1818
        %v1820 = vand.u32 %v1819, 4294901760
        %1821 = vmatmul.f32.gmra.mxu0 %v1820
        %v1822 = vpop.f32.mrf.mxu0
        %v1823 = vadd.f32 0.0, %v1822
        %1824 = vdwg.mxu0
        %1825 = vmatpush.xpose.msra.mxu0 0.0
        %1826 = vmatpush.xpose.msra.mxu0 0.0
        %1827 = vmatpush.xpose.msra.mxu0 0.0
        %1828 = vmatpush.xpose.msra.mxu0 0.0
        %1829 = vmatpush.xpose.msra.mxu0 0.0
        %1830 = vmatpush.xpose.msra.mxu0 0.0
        %1831 = vmatpush.xpose.msra.mxu0 0.0
        %1832 = vmatpush.xpose.msra.mxu0 0.0
        %1833 = vmatpush.xpose.msra.mxu0 0.0
        %1834 = vmatpush.xpose.msra.mxu0 0.0
        %1835 = vmatpush.xpose.msra.mxu0 0.0
        %1836 = vmatpush.xpose.msra.mxu0 0.0
        %1837 = vmatpush.xpose.msra.mxu0 0.0
        %1838 = vmatpush.xpose.msra.mxu0 0.0
        %1839 = vmatpush.xpose.msra.mxu0 0.0
        %v1840 = vand.u32 %v1493, 4294901760
        %v1841 = vsub.f32 %v1493, %v1840
        %v1842 = vand.u32 %v1841, 4294901760
        %v1843 = vsub.f32 %v1841, %v1842
        %v1844 = vand.u32 %v1843, 4294901760
        %1845 = vmatpush.xpose.msra.mxu0 %v1844
        %v1846 = vand.u32 %v1795, 4294901760
        %1847 = vmatmul.f32.gmra.mxu0 %v1846
        %v1848 = vpop.f32.mrf.mxu0
        %v1849 = vadd.f32 %v1823, %v1848
        %1850 = vdwg.mxu0
        %1851 = vmatpush.xpose.msra.mxu0 0.0
        %1852 = vmatpush.xpose.msra.mxu0 0.0
        %1853 = vmatpush.xpose.msra.mxu0 0.0
        %1854 = vmatpush.xpose.msra.mxu0 0.0
        %1855 = vmatpush.xpose.msra.mxu0 0.0
        %1856 = vmatpush.xpose.msra.mxu0 0.0
        %1857 = vmatpush.xpose.msra.mxu0 0.0
        %1858 = vmatpush.xpose.msra.mxu0 0.0
        %1859 = vmatpush.xpose.msra.mxu0 0.0
        %1860 = vmatpush.xpose.msra.mxu0 0.0
        %1861 = vmatpush.xpose.msra.mxu0 0.0
        %1862 = vmatpush.xpose.msra.mxu0 0.0
        %1863 = vmatpush.xpose.msra.mxu0 0.0
        %1864 = vmatpush.xpose.msra.mxu0 0.0
        %1865 = vmatpush.xpose.msra.mxu0 0.0
        %v1866 = vand.u32 %v1493, 4294901760
        %v1867 = vsub.f32 %v1493, %v1866
        %1868 = vmatpush.xpose.msra.mxu0 %v1867
        %v1869 = vand.u32 %v1795, 4294901760
        %v1870 = vsub.f32 %v1795, %v1869
        %1871 = vmatmul.f32.gmra.mxu0 %v1870
        %v1872 = vpop.f32.mrf.mxu0
        %v1873 = vadd.f32 %v1849, %v1872
        %1874 = vdwg.mxu0
        %1875 = vmatpush.xpose.msra.mxu0 0.0
        %1876 = vmatpush.xpose.msra.mxu0 0.0
        %1877 = vmatpush.xpose.msra.mxu0 0.0
        %1878 = vmatpush.xpose.msra.mxu0 0.0
        %1879 = vmatpush.xpose.msra.mxu0 0.0
        %1880 = vmatpush.xpose.msra.mxu0 0.0
        %1881 = vmatpush.xpose.msra.mxu0 0.0
        %1882 = vmatpush.xpose.msra.mxu0 0.0
        %1883 = vmatpush.xpose.msra.mxu0 0.0
        %1884 = vmatpush.xpose.msra.mxu0 0.0
        %1885 = vmatpush.xpose.msra.mxu0 0.0
        %1886 = vmatpush.xpose.msra.mxu0 0.0
        %1887 = vmatpush.xpose.msra.mxu0 0.0
        %1888 = vmatpush.xpose.msra.mxu0 0.0
        %1889 = vmatpush.xpose.msra.mxu0 0.0
        %v1890 = vand.u32 %v1493, 4294901760
        %1891 = vmatpush.xpose.msra.mxu0 %v1890
        %v1892 = vand.u32 %v1795, 4294901760
        %v1893 = vsub.f32 %v1795, %v1892
        %v1894 = vand.u32 %v1893, 4294901760
        %1895 = vmatmul.f32.gmra.mxu0 %v1894
        %v1896 = vpop.f32.mrf.mxu0
        %v1897 = vadd.f32 %v1873, %v1896
        %1898 = vdwg.mxu0
        %1899 = vmatpush.xpose.msra.mxu0 0.0
        %1900 = vmatpush.xpose.msra.mxu0 0.0
        %1901 = vmatpush.xpose.msra.mxu0 0.0
        %1902 = vmatpush.xpose.msra.mxu0 0.0
        %1903 = vmatpush.xpose.msra.mxu0 0.0
        %1904 = vmatpush.xpose.msra.mxu0 0.0
        %1905 = vmatpush.xpose.msra.mxu0 0.0
        %1906 = vmatpush.xpose.msra.mxu0 0.0
        %1907 = vmatpush.xpose.msra.mxu0 0.0
        %1908 = vmatpush.xpose.msra.mxu0 0.0
        %1909 = vmatpush.xpose.msra.mxu0 0.0
        %1910 = vmatpush.xpose.msra.mxu0 0.0
        %1911 = vmatpush.xpose.msra.mxu0 0.0
        %1912 = vmatpush.xpose.msra.mxu0 0.0
        %1913 = vmatpush.xpose.msra.mxu0 0.0
        %v1914 = vand.u32 %v1493, 4294901760
        %v1915 = vsub.f32 %v1493, %v1914
        %v1916 = vand.u32 %v1915, 4294901760
        %1917 = vmatpush.xpose.msra.mxu0 %v1916
        %v1918 = vand.u32 %v1795, 4294901760
        %1919 = vmatmul.f32.gmra.mxu0 %v1918
        %v1920 = vpop.f32.mrf.mxu0
        %v1921 = vadd.f32 %v1897, %v1920
        %1922 = vdwg.mxu0
        %1923 = vmatpush.xpose.msra.mxu0 0.0
        %1924 = vmatpush.xpose.msra.mxu0 0.0
        %1925 = vmatpush.xpose.msra.mxu0 0.0
        %1926 = vmatpush.xpose.msra.mxu0 0.0
        %1927 = vmatpush.xpose.msra.mxu0 0.0
        %1928 = vmatpush.xpose.msra.mxu0 0.0
        %1929 = vmatpush.xpose.msra.mxu0 0.0
        %1930 = vmatpush.xpose.msra.mxu0 0.0
        %1931 = vmatpush.xpose.msra.mxu0 0.0
        %1932 = vmatpush.xpose.msra.mxu0 0.0
        %1933 = vmatpush.xpose.msra.mxu0 0.0
        %1934 = vmatpush.xpose.msra.mxu0 0.0
        %1935 = vmatpush.xpose.msra.mxu0 0.0
        %1936 = vmatpush.xpose.msra.mxu0 0.0
        %1937 = vmatpush.xpose.msra.mxu0 0.0
        %v1938 = vand.u32 %v1493, 4294901760
        %1939 = vmatpush.xpose.msra.mxu0 %v1938
        %v1940 = vand.u32 %v1795, 4294901760
        %1941 = vmatmul.f32.gmra.mxu0 %v1940
        %v1942 = vpop.f32.mrf.mxu0
        %v1943 = vadd.f32 %v1921, %v1942
        %1944 = vdwg.mxu0
        %1945 = vmatpush.xpose.msra.mxu0 0.0
        %1946 = vmatpush.xpose.msra.mxu0 0.0
        %1947 = vmatpush.xpose.msra.mxu0 0.0
        %1948 = vmatpush.xpose.msra.mxu0 0.0
        %1949 = vmatpush.xpose.msra.mxu0 0.0
        %1950 = vmatpush.xpose.msra.mxu0 0.0
        %1951 = vmatpush.xpose.msra.mxu0 0.0
        %1952 = vmatpush.xpose.msra.mxu0 0.0
        %1953 = vmatpush.xpose.msra.mxu0 0.0
        %1954 = vmatpush.xpose.msra.mxu0 0.0
        %1955 = vmatpush.xpose.msra.mxu0 0.0
        %1956 = vmatpush.xpose.msra.mxu0 0.0
        %1957 = vmatpush.xpose.msra.mxu0 0.0
        %1958 = vmatpush.xpose.msra.mxu0 0.0
        %1959 = vmatpush.xpose.msra.mxu0 0.0
        %v1960 = vand.u32 %v1494, 4294901760
        %1961 = vmatpush.xpose.msra.mxu0 %v1960
        %v1962 = vand.u32 %v1796, 4294901760
        %v1963 = vsub.f32 %v1796, %v1962
        %v1964 = vand.u32 %v1963, 4294901760
        %v1965 = vsub.f32 %v1963, %v1964
        %v1966 = vand.u32 %v1965, 4294901760
        %1967 = vmatmul.f32.gmra.mxu0 %v1966
        %v1968 = vpop.f32.mrf.mxu0
        %v1969 = vadd.f32 %v1943, %v1968
        %1970 = vdwg.mxu0
        %1971 = vmatpush.xpose.msra.mxu0 0.0
        %1972 = vmatpush.xpose.msra.mxu0 0.0
        %1973 = vmatpush.xpose.msra.mxu0 0.0
        %1974 = vmatpush.xpose.msra.mxu0 0.0
        %1975 = vmatpush.xpose.msra.mxu0 0.0
        %1976 = vmatpush.xpose.msra.mxu0 0.0
        %1977 = vmatpush.xpose.msra.mxu0 0.0
        %1978 = vmatpush.xpose.msra.mxu0 0.0
        %1979 = vmatpush.xpose.msra.mxu0 0.0
        %1980 = vmatpush.xpose.msra.mxu0 0.0
        %1981 = vmatpush.xpose.msra.mxu0 0.0
        %1982 = vmatpush.xpose.msra.mxu0 0.0
        %1983 = vmatpush.xpose.msra.mxu0 0.0
        %1984 = vmatpush.xpose.msra.mxu0 0.0
        %1985 = vmatpush.xpose.msra.mxu0 0.0
        %v1986 = vand.u32 %v1494, 4294901760
        %v1987 = vsub.f32 %v1494, %v1986
        %v1988 = vand.u32 %v1987, 4294901760
        %v1989 = vsub.f32 %v1987, %v1988
        %v1990 = vand.u32 %v1989, 4294901760
        %1991 = vmatpush.xpose.msra.mxu0 %v1990
        %v1992 = vand.u32 %v1796, 4294901760
        %1993 = vmatmul.f32.gmra.mxu0 %v1992
        %v1994 = vpop.f32.mrf.mxu0
        %v1995 = vadd.f32 %v1969, %v1994
        %1996 = vdwg.mxu0
        %1997 = vmatpush.xpose.msra.mxu0 0.0
        %1998 = vmatpush.xpose.msra.mxu0 0.0
        %1999 = vmatpush.xpose.msra.mxu0 0.0
        %2000 = vmatpush.xpose.msra.mxu0 0.0
        %2001 = vmatpush.xpose.msra.mxu0 0.0
        %2002 = vmatpush.xpose.msra.mxu0 0.0
        %2003 = vmatpush.xpose.msra.mxu0 0.0
        %2004 = vmatpush.xpose.msra.mxu0 0.0
        %2005 = vmatpush.xpose.msra.mxu0 0.0
        %2006 = vmatpush.xpose.msra.mxu0 0.0
        %2007 = vmatpush.xpose.msra.mxu0 0.0
        %2008 = vmatpush.xpose.msra.mxu0 0.0
        %2009 = vmatpush.xpose.msra.mxu0 0.0
        %2010 = vmatpush.xpose.msra.mxu0 0.0
        %2011 = vmatpush.xpose.msra.mxu0 0.0
        %v2012 = vand.u32 %v1494, 4294901760
        %v2013 = vsub.f32 %v1494, %v2012
        %2014 = vmatpush.xpose.msra.mxu0 %v2013
        %v2015 = vand.u32 %v1796, 4294901760
        %v2016 = vsub.f32 %v1796, %v2015
        %2017 = vmatmul.f32.gmra.mxu0 %v2016
        %v2018 = vpop.f32.mrf.mxu0
        %v2019 = vadd.f32 %v1995, %v2018
        %2020 = vdwg.mxu0
        %2021 = vmatpush.xpose.msra.mxu0 0.0
        %2022 = vmatpush.xpose.msra.mxu0 0.0
        %2023 = vmatpush.xpose.msra.mxu0 0.0
        %2024 = vmatpush.xpose.msra.mxu0 0.0
        %2025 = vmatpush.xpose.msra.mxu0 0.0
        %2026 = vmatpush.xpose.msra.mxu0 0.0
        %2027 = vmatpush.xpose.msra.mxu0 0.0
        %2028 = vmatpush.xpose.msra.mxu0 0.0
        %2029 = vmatpush.xpose.msra.mxu0 0.0
        %2030 = vmatpush.xpose.msra.mxu0 0.0
        %2031 = vmatpush.xpose.msra.mxu0 0.0
        %2032 = vmatpush.xpose.msra.mxu0 0.0
        %2033 = vmatpush.xpose.msra.mxu0 0.0
        %2034 = vmatpush.xpose.msra.mxu0 0.0
        %2035 = vmatpush.xpose.msra.mxu0 0.0
        %v2036 = vand.u32 %v1494, 4294901760
        %2037 = vmatpush.xpose.msra.mxu0 %v2036
        %v2038 = vand.u32 %v1796, 4294901760
        %v2039 = vsub.f32 %v1796, %v2038
        %v2040 = vand.u32 %v2039, 4294901760
        %2041 = vmatmul.f32.gmra.mxu0 %v2040
        %v2042 = vpop.f32.mrf.mxu0
        %v2043 = vadd.f32 %v2019, %v2042
        %2044 = vdwg.mxu0
        %2045 = vmatpush.xpose.msra.mxu0 0.0
        %2046 = vmatpush.xpose.msra.mxu0 0.0
        %2047 = vmatpush.xpose.msra.mxu0 0.0
        %2048 = vmatpush.xpose.msra.mxu0 0.0
        %2049 = vmatpush.xpose.msra.mxu0 0.0
        %2050 = vmatpush.xpose.msra.mxu0 0.0
        %2051 = vmatpush.xpose.msra.mxu0 0.0
        %2052 = vmatpush.xpose.msra.mxu0 0.0
        %2053 = vmatpush.xpose.msra.mxu0 0.0
        %2054 = vmatpush.xpose.msra.mxu0 0.0
        %2055 = vmatpush.xpose.msra.mxu0 0.0
        %2056 = vmatpush.xpose.msra.mxu0 0.0
        %2057 = vmatpush.xpose.msra.mxu0 0.0
        %2058 = vmatpush.xpose.msra.mxu0 0.0
        %2059 = vmatpush.xpose.msra.mxu0 0.0
        %v2060 = vand.u32 %v1494, 4294901760
        %v2061 = vsub.f32 %v1494, %v2060
        %v2062 = vand.u32 %v2061, 4294901760
        %2063 = vmatpush.xpose.msra.mxu0 %v2062
        %v2064 = vand.u32 %v1796, 4294901760
        %2065 = vmatmul.f32.gmra.mxu0 %v2064
        %v2066 = vpop.f32.mrf.mxu0
        %v2067 = vadd.f32 %v2043, %v2066
        %2068 = vdwg.mxu0
        %2069 = vmatpush.xpose.msra.mxu0 0.0
        %2070 = vmatpush.xpose.msra.mxu0 0.0
        %2071 = vmatpush.xpose.msra.mxu0 0.0
        %2072 = vmatpush.xpose.msra.mxu0 0.0
        %2073 = vmatpush.xpose.msra.mxu0 0.0
        %2074 = vmatpush.xpose.msra.mxu0 0.0
        %2075 = vmatpush.xpose.msra.mxu0 0.0
        %2076 = vmatpush.xpose.msra.mxu0 0.0
        %2077 = vmatpush.xpose.msra.mxu0 0.0
        %2078 = vmatpush.xpose.msra.mxu0 0.0
        %2079 = vmatpush.xpose.msra.mxu0 0.0
        %2080 = vmatpush.xpose.msra.mxu0 0.0
        %2081 = vmatpush.xpose.msra.mxu0 0.0
        %2082 = vmatpush.xpose.msra.mxu0 0.0
        %2083 = vmatpush.xpose.msra.mxu0 0.0
        %v2084 = vand.u32 %v1494, 4294901760
        %2085 = vmatpush.xpose.msra.mxu0 %v2084
        %v2086 = vand.u32 %v1796, 4294901760
        %2087 = vmatmul.f32.gmra.mxu0 %v2086
        %v2088 = vpop.f32.mrf.mxu0
        %v2089 = vadd.f32 %v2067, %v2088
        %2090 = vdwg.mxu0
        %v2091 = vmul.f32 %v2089, 0.00390625
        %v2092 = vmul.f32 %v1792, %v1792
        %v2093 = vsub.f32 %v2091, %v2092
        %v2094 = vmax.f32 %v2093, 0.0
        %v2095 = vadd.f32 %v2094, 1e-05
        %v2096 = vrsqrt.pop %v2095
        %v2097 = vmul.f32 %v2096, %v2095
        %v2098 = vmul.f32 %v2097, %v2096
        %v2099 = vmul.f32 0.5, %v2098
        %v2100 = vsub.f32 1.5, %v2099
        %v2101 = vmul.f32 %v2096, %v2100
        %vm2102 = vweird.f32 %v2095
        %vm2103 = vweird.f32 %v2096
        %vm2104 = vmor %vm2102, %vm2103
        %v2105 = vsel %vm2104, %v2096, %v2101
        %2107 = vset.pattern.permute.xlu0 0
        %2108 = vperm.xlu0 %2107, %v277
        %v2109 = vpop.permute.xlu0 %2108
        %v2111 = vmul.f32 %v2109, %v2105
        %v2112 = vmul.f32 %v1792, %v2111
        %2114 = vset.pattern.permute.xlu0 0
        %2115 = vperm.xlu0 %2114, %v278
        %v2116 = vpop.permute.xlu0 %2115
        %v2118 = vsub.f32 %v2116, %v2112
        %vm2119 = vcmask 19456
        %v2120 = vsel %vm2119, %v2118, 0.0
        %2121 = vadd.xlane.f32.xlu0 %v2120
        %v2122 = vpop.xlane.xlu0 %2121
        %vm2123 = vcmask 23552
        %v2125 = vsel %vm2123, %v2111, 0
        %v2128 = vsel %vm432, %v1491, 0
        %v2131 = vsel %vm432, %v1492, 0
        %2133 = vmatpush.msra.mxu0 0.0
        %2134 = vmatpush.msra.mxu0 0.0
        %2135 = vmatpush.msra.mxu0 0.0
        %2136 = vmatpush.msra.mxu0 0.0
        %2137 = vmatpush.msra.mxu0 0.0
        %2138 = vmatpush.msra.mxu0 0.0
        %2139 = vmatpush.msra.mxu0 0.0
        %2140 = vmatpush.msra.mxu0 0.0
        %2141 = vmatpush.msra.mxu0 0.0
        %2142 = vmatpush.msra.mxu0 0.0
        %2143 = vmatpush.msra.mxu0 0.0
        %2144 = vmatpush.msra.mxu0 0.0
        %2145 = vmatpush.msra.mxu0 0.0
        %2146 = vmatpush.msra.mxu0 0.0
        %2147 = vmatpush.msra.mxu0 0.0
        %v2148 = vand.u32 %v2128, 4294901760
        %2149 = vmatpush.msra.mxu0 %v2148
        %v2150 = vand.u32 %v2125, 4294901760
        %v2151 = vsub.f32 %v2125, %v2150
        %v2152 = vand.u32 %v2151, 4294901760
        %v2153 = vsub.f32 %v2151, %v2152
        %v2154 = vand.u32 %v2153, 4294901760
        %2155 = vmatmul.f32.gmra.mxu0 %v2154
        %v2156 = vpop.f32.mrf.mxu0
        %v2157 = vadd.f32 0.0, %v2156
        %2158 = vdwg.mxu0
        %2159 = vmatpush.msra.mxu0 0.0
        %2160 = vmatpush.msra.mxu0 0.0
        %2161 = vmatpush.msra.mxu0 0.0
        %2162 = vmatpush.msra.mxu0 0.0
        %2163 = vmatpush.msra.mxu0 0.0
        %2164 = vmatpush.msra.mxu0 0.0
        %2165 = vmatpush.msra.mxu0 0.0
        %2166 = vmatpush.msra.mxu0 0.0
        %2167 = vmatpush.msra.mxu0 0.0
        %2168 = vmatpush.msra.mxu0 0.0
        %2169 = vmatpush.msra.mxu0 0.0
        %2170 = vmatpush.msra.mxu0 0.0
        %2171 = vmatpush.msra.mxu0 0.0
        %2172 = vmatpush.msra.mxu0 0.0
        %2173 = vmatpush.msra.mxu0 0.0
        %v2174 = vand.u32 %v2128, 4294901760
        %v2175 = vsub.f32 %v2128, %v2174
        %v2176 = vand.u32 %v2175, 4294901760
        %v2177 = vsub.f32 %v2175, %v2176
        %v2178 = vand.u32 %v2177, 4294901760
        %2179 = vmatpush.msra.mxu0 %v2178
        %v2180 = vand.u32 %v2125, 4294901760
        %2181 = vmatmul.f32.gmra.mxu0 %v2180
        %v2182 = vpop.f32.mrf.mxu0
        %v2183 = vadd.f32 %v2157, %v2182
        %2184 = vdwg.mxu0
        %2185 = vmatpush.msra.mxu0 0.0
        %2186 = vmatpush.msra.mxu0 0.0
        %2187 = vmatpush.msra.mxu0 0.0
        %2188 = vmatpush.msra.mxu0 0.0
        %2189 = vmatpush.msra.mxu0 0.0
        %2190 = vmatpush.msra.mxu0 0.0
        %2191 = vmatpush.msra.mxu0 0.0
        %2192 = vmatpush.msra.mxu0 0.0
        %2193 = vmatpush.msra.mxu0 0.0
        %2194 = vmatpush.msra.mxu0 0.0
        %2195 = vmatpush.msra.mxu0 0.0
        %2196 = vmatpush.msra.mxu0 0.0
        %2197 = vmatpush.msra.mxu0 0.0
        %2198 = vmatpush.msra.mxu0 0.0
        %2199 = vmatpush.msra.mxu0 0.0
        %v2200 = vand.u32 %v2128, 4294901760
        %v2201 = vsub.f32 %v2128, %v2200
        %2202 = vmatpush.msra.mxu0 %v2201
        %v2203 = vand.u32 %v2125, 4294901760
        %v2204 = vsub.f32 %v2125, %v2203
        %2205 = vmatmul.f32.gmra.mxu0 %v2204
        %v2206 = vpop.f32.mrf.mxu0
        %v2207 = vadd.f32 %v2183, %v2206
        %2208 = vdwg.mxu0
        %2209 = vmatpush.msra.mxu0 0.0
        %2210 = vmatpush.msra.mxu0 0.0
        %2211 = vmatpush.msra.mxu0 0.0
        %2212 = vmatpush.msra.mxu0 0.0
        %2213 = vmatpush.msra.mxu0 0.0
        %2214 = vmatpush.msra.mxu0 0.0
        %2215 = vmatpush.msra.mxu0 0.0
        %2216 = vmatpush.msra.mxu0 0.0
        %2217 = vmatpush.msra.mxu0 0.0
        %2218 = vmatpush.msra.mxu0 0.0
        %2219 = vmatpush.msra.mxu0 0.0
        %2220 = vmatpush.msra.mxu0 0.0
        %2221 = vmatpush.msra.mxu0 0.0
        %2222 = vmatpush.msra.mxu0 0.0
        %2223 = vmatpush.msra.mxu0 0.0
        %v2224 = vand.u32 %v2128, 4294901760
        %2225 = vmatpush.msra.mxu0 %v2224
        %v2226 = vand.u32 %v2125, 4294901760
        %v2227 = vsub.f32 %v2125, %v2226
        %v2228 = vand.u32 %v2227, 4294901760
        %2229 = vmatmul.f32.gmra.mxu0 %v2228
        %v2230 = vpop.f32.mrf.mxu0
        %v2231 = vadd.f32 %v2207, %v2230
        %2232 = vdwg.mxu0
        %2233 = vmatpush.msra.mxu0 0.0
        %2234 = vmatpush.msra.mxu0 0.0
        %2235 = vmatpush.msra.mxu0 0.0
        %2236 = vmatpush.msra.mxu0 0.0
        %2237 = vmatpush.msra.mxu0 0.0
        %2238 = vmatpush.msra.mxu0 0.0
        %2239 = vmatpush.msra.mxu0 0.0
        %2240 = vmatpush.msra.mxu0 0.0
        %2241 = vmatpush.msra.mxu0 0.0
        %2242 = vmatpush.msra.mxu0 0.0
        %2243 = vmatpush.msra.mxu0 0.0
        %2244 = vmatpush.msra.mxu0 0.0
        %2245 = vmatpush.msra.mxu0 0.0
        %2246 = vmatpush.msra.mxu0 0.0
        %2247 = vmatpush.msra.mxu0 0.0
        %v2248 = vand.u32 %v2128, 4294901760
        %v2249 = vsub.f32 %v2128, %v2248
        %v2250 = vand.u32 %v2249, 4294901760
        %2251 = vmatpush.msra.mxu0 %v2250
        %v2252 = vand.u32 %v2125, 4294901760
        %2253 = vmatmul.f32.gmra.mxu0 %v2252
        %v2254 = vpop.f32.mrf.mxu0
        %v2255 = vadd.f32 %v2231, %v2254
        %2256 = vdwg.mxu0
        %2257 = vmatpush.msra.mxu0 0.0
        %2258 = vmatpush.msra.mxu0 0.0
        %2259 = vmatpush.msra.mxu0 0.0
        %2260 = vmatpush.msra.mxu0 0.0
        %2261 = vmatpush.msra.mxu0 0.0
        %2262 = vmatpush.msra.mxu0 0.0
        %2263 = vmatpush.msra.mxu0 0.0
        %2264 = vmatpush.msra.mxu0 0.0
        %2265 = vmatpush.msra.mxu0 0.0
        %2266 = vmatpush.msra.mxu0 0.0
        %2267 = vmatpush.msra.mxu0 0.0
        %2268 = vmatpush.msra.mxu0 0.0
        %2269 = vmatpush.msra.mxu0 0.0
        %2270 = vmatpush.msra.mxu0 0.0
        %2271 = vmatpush.msra.mxu0 0.0
        %v2272 = vand.u32 %v2128, 4294901760
        %2273 = vmatpush.msra.mxu0 %v2272
        %v2274 = vand.u32 %v2125, 4294901760
        %2275 = vmatmul.f32.gmra.mxu0 %v2274
        %v2276 = vpop.f32.mrf.mxu0
        %v2277 = vadd.f32 %v2255, %v2276
        %2278 = vdwg.mxu0
        %2279 = vmatpush.msra.mxu0 0.0
        %2280 = vmatpush.msra.mxu0 0.0
        %2281 = vmatpush.msra.mxu0 0.0
        %2282 = vmatpush.msra.mxu0 0.0
        %2283 = vmatpush.msra.mxu0 0.0
        %2284 = vmatpush.msra.mxu0 0.0
        %2285 = vmatpush.msra.mxu0 0.0
        %2286 = vmatpush.msra.mxu0 0.0
        %2287 = vmatpush.msra.mxu0 0.0
        %2288 = vmatpush.msra.mxu0 0.0
        %2289 = vmatpush.msra.mxu0 0.0
        %2290 = vmatpush.msra.mxu0 0.0
        %2291 = vmatpush.msra.mxu0 0.0
        %2292 = vmatpush.msra.mxu0 0.0
        %2293 = vmatpush.msra.mxu0 0.0
        %v2294 = vand.u32 %v2131, 4294901760
        %2295 = vmatpush.msra.mxu0 %v2294
        %v2296 = vand.u32 %v2125, 4294901760
        %v2297 = vsub.f32 %v2125, %v2296
        %v2298 = vand.u32 %v2297, 4294901760
        %v2299 = vsub.f32 %v2297, %v2298
        %v2300 = vand.u32 %v2299, 4294901760
        %2301 = vmatmul.f32.gmra.mxu0 %v2300
        %v2302 = vpop.f32.mrf.mxu0
        %v2303 = vadd.f32 0.0, %v2302
        %2304 = vdwg.mxu0
        %2305 = vmatpush.msra.mxu0 0.0
        %2306 = vmatpush.msra.mxu0 0.0
        %2307 = vmatpush.msra.mxu0 0.0
        %2308 = vmatpush.msra.mxu0 0.0
        %2309 = vmatpush.msra.mxu0 0.0
        %2310 = vmatpush.msra.mxu0 0.0
        %2311 = vmatpush.msra.mxu0 0.0
        %2312 = vmatpush.msra.mxu0 0.0
        %2313 = vmatpush.msra.mxu0 0.0
        %2314 = vmatpush.msra.mxu0 0.0
        %2315 = vmatpush.msra.mxu0 0.0
        %2316 = vmatpush.msra.mxu0 0.0
        %2317 = vmatpush.msra.mxu0 0.0
        %2318 = vmatpush.msra.mxu0 0.0
        %2319 = vmatpush.msra.mxu0 0.0
        %v2320 = vand.u32 %v2131, 4294901760
        %v2321 = vsub.f32 %v2131, %v2320
        %v2322 = vand.u32 %v2321, 4294901760
        %v2323 = vsub.f32 %v2321, %v2322
        %v2324 = vand.u32 %v2323, 4294901760
        %2325 = vmatpush.msra.mxu0 %v2324
        %v2326 = vand.u32 %v2125, 4294901760
        %2327 = vmatmul.f32.gmra.mxu0 %v2326
        %v2328 = vpop.f32.mrf.mxu0
        %v2329 = vadd.f32 %v2303, %v2328
        %2330 = vdwg.mxu0
        %2331 = vmatpush.msra.mxu0 0.0
        %2332 = vmatpush.msra.mxu0 0.0
        %2333 = vmatpush.msra.mxu0 0.0
        %2334 = vmatpush.msra.mxu0 0.0
        %2335 = vmatpush.msra.mxu0 0.0
        %2336 = vmatpush.msra.mxu0 0.0
        %2337 = vmatpush.msra.mxu0 0.0
        %2338 = vmatpush.msra.mxu0 0.0
        %2339 = vmatpush.msra.mxu0 0.0
        %2340 = vmatpush.msra.mxu0 0.0
        %2341 = vmatpush.msra.mxu0 0.0
        %2342 = vmatpush.msra.mxu0 0.0
        %2343 = vmatpush.msra.mxu0 0.0
        %2344 = vmatpush.msra.mxu0 0.0
        %2345 = vmatpush.msra.mxu0 0.0
        %v2346 = vand.u32 %v2131, 4294901760
        %v2347 = vsub.f32 %v2131, %v2346
        %2348 = vmatpush.msra.mxu0 %v2347
        %v2349 = vand.u32 %v2125, 4294901760
        %v2350 = vsub.f32 %v2125, %v2349
        %2351 = vmatmul.f32.gmra.mxu0 %v2350
        %v2352 = vpop.f32.mrf.mxu0
        %v2353 = vadd.f32 %v2329, %v2352
        %2354 = vdwg.mxu0
        %2355 = vmatpush.msra.mxu0 0.0
        %2356 = vmatpush.msra.mxu0 0.0
        %2357 = vmatpush.msra.mxu0 0.0
        %2358 = vmatpush.msra.mxu0 0.0
        %2359 = vmatpush.msra.mxu0 0.0
        %2360 = vmatpush.msra.mxu0 0.0
        %2361 = vmatpush.msra.mxu0 0.0
        %2362 = vmatpush.msra.mxu0 0.0
        %2363 = vmatpush.msra.mxu0 0.0
        %2364 = vmatpush.msra.mxu0 0.0
        %2365 = vmatpush.msra.mxu0 0.0
        %2366 = vmatpush.msra.mxu0 0.0
        %2367 = vmatpush.msra.mxu0 0.0
        %2368 = vmatpush.msra.mxu0 0.0
        %2369 = vmatpush.msra.mxu0 0.0
        %v2370 = vand.u32 %v2131, 4294901760
        %2371 = vmatpush.msra.mxu0 %v2370
        %v2372 = vand.u32 %v2125, 4294901760
        %v2373 = vsub.f32 %v2125, %v2372
        %v2374 = vand.u32 %v2373, 4294901760
        %2375 = vmatmul.f32.gmra.mxu0 %v2374
        %v2376 = vpop.f32.mrf.mxu0
        %v2377 = vadd.f32 %v2353, %v2376
        %2378 = vdwg.mxu0
        %2379 = vmatpush.msra.mxu0 0.0
        %2380 = vmatpush.msra.mxu0 0.0
        %2381 = vmatpush.msra.mxu0 0.0
        %2382 = vmatpush.msra.mxu0 0.0
        %2383 = vmatpush.msra.mxu0 0.0
        %2384 = vmatpush.msra.mxu0 0.0
        %2385 = vmatpush.msra.mxu0 0.0
        %2386 = vmatpush.msra.mxu0 0.0
        %2387 = vmatpush.msra.mxu0 0.0
        %2388 = vmatpush.msra.mxu0 0.0
        %2389 = vmatpush.msra.mxu0 0.0
        %2390 = vmatpush.msra.mxu0 0.0
        %2391 = vmatpush.msra.mxu0 0.0
        %2392 = vmatpush.msra.mxu0 0.0
        %2393 = vmatpush.msra.mxu0 0.0
        %v2394 = vand.u32 %v2131, 4294901760
        %v2395 = vsub.f32 %v2131, %v2394
        %v2396 = vand.u32 %v2395, 4294901760
        %2397 = vmatpush.msra.mxu0 %v2396
        %v2398 = vand.u32 %v2125, 4294901760
        %2399 = vmatmul.f32.gmra.mxu0 %v2398
        %v2400 = vpop.f32.mrf.mxu0
        %v2401 = vadd.f32 %v2377, %v2400
        %2402 = vdwg.mxu0
        %2403 = vmatpush.msra.mxu0 0.0
        %2404 = vmatpush.msra.mxu0 0.0
        %2405 = vmatpush.msra.mxu0 0.0
        %2406 = vmatpush.msra.mxu0 0.0
        %2407 = vmatpush.msra.mxu0 0.0
        %2408 = vmatpush.msra.mxu0 0.0
        %2409 = vmatpush.msra.mxu0 0.0
        %2410 = vmatpush.msra.mxu0 0.0
        %2411 = vmatpush.msra.mxu0 0.0
        %2412 = vmatpush.msra.mxu0 0.0
        %2413 = vmatpush.msra.mxu0 0.0
        %2414 = vmatpush.msra.mxu0 0.0
        %2415 = vmatpush.msra.mxu0 0.0
        %2416 = vmatpush.msra.mxu0 0.0
        %2417 = vmatpush.msra.mxu0 0.0
        %v2418 = vand.u32 %v2131, 4294901760
        %2419 = vmatpush.msra.mxu0 %v2418
        %v2420 = vand.u32 %v2125, 4294901760
        %2421 = vmatmul.f32.gmra.mxu0 %v2420
        %v2422 = vpop.f32.mrf.mxu0
        %v2423 = vadd.f32 %v2401, %v2422
        %2424 = vdwg.mxu0
        %v2427 = vrot.slane %v2423, 4
        %v2428 = vsel %vm285, %v2277, %v2427
        %v2430 = vmul.f32 %v270, %v2428
        %v2433 = vunpack.c.l.s4 839922192
        %v2434 = vunpack.c.0.s8 %v2433
        %v2435 = vperm.slane %v2122, %v2434
        %v2437 = vadd.f32 %v2430, %v2435
        %v2438 = vmax.f32 %v2437, 0.0
        %2439 = vst [vmem:[%s259] sm:$0xff] %v2438
        %s2440 = sand.u32 %s164, 1
        %s2441 = scalar_lea.sflag [#allocation3], %s2440
        %s2442 = sand.u32 %s164, 1
        %s2443 = smul.addr %s2442, 8
        %s2444 = scalar_lea.vmem [#allocation2], %s2443
        // Predicated region
        $region45: #{tpu_custom_call.1} parent=43 // pred_check
          %p2445 = pneg %p174
        $region46: #{tpu_custom_call.1} parent=43 // pred_check_branch
          %2447 = sbr.rel (%p2445) target = $region48
        $region47: #{tpu_custom_call.1} parent=43 // pred_region
          %2449 = vsyncadd %s2441, 0
          %s2450 = smul.addr %s20, 2
          %s2451 = smul.addr %s2450, 4
          %s2452 = scalar_lea.hbm %s6, %s2451
          %s2454 = sshll.u32 %s2444, 4
          %s2455 = int_to_ptr.vmem [resolvable:$true] %s2454
          %s2456 = sshll.u32 %s2452, 4
          %s2457 = int_to_ptr.hbm [resolvable:$true] %s2456
          %2459 = dma.vmem_to_hbm [thread:$0]  %s2455, 128, %s2457, %s2441
        $region48: #{tpu_custom_call.1} parent=43 // pred_fallthru
          _
      $region44: #{tpu_custom_call.1} parent=5 // pred_fallthru
        _
      %p2460 = scmp.le.s32.totalorder 2, %s15
      // Predicated region
      $region49: #{tpu_custom_call.1} parent=5 // pred_check
        %p2461 = pneg %p2460
      $region50: #{tpu_custom_call.1} parent=5 // pred_check_branch
        %2463 = sbr.rel (%p2461) target = $region52
      $region51: #{tpu_custom_call.1} parent=5 // pred_region
        %s2464 = ssub.s32 %s15, 2
        // Predicated region
        $region53: #{tpu_custom_call.1} parent=51 // pred_check
          %p2465 = pneg %p180
        $region54: #{tpu_custom_call.1} parent=51 // pred_check_branch
          %2467 = sbr.rel (%p2465) target = $region56
        $region55: #{tpu_custom_call.1} parent=51 // pred_region
          %s2468 = sand.u32 %s165, 1
          %s2469 = scalar_lea.sflag [#allocation3], %s2468
          %s2470 = sand.u32 %s165, 1
          %s2471 = smul.addr %s2470, 8
          %s2472 = scalar_lea.vmem [#allocation2], %s2471
          %2474 = dma.done %s2469, 128
        $region56: #{tpu_custom_call.1} parent=51 // pred_fallthru
          _
      $region52: #{tpu_custom_call.1} parent=5 // pred_fallthru
        _
    $region6: #{tpu_custom_call.1} parent=1 // loop_footer
      %s19 = sadd.s32 1, %s15
    $region7: #{tpu_custom_call.1} parent=1 // loop_footer_branch
      %14 = sbr.rel target = $region3
    $region8: #{tpu_custom_call.1} parent=1 // loop_exit
      _
    %2475 = vsyncpa [#allocation3], 1
    %s2476 = scalar_lea.sflag [#allocation3], 1
    %2477 = vsyncpa %s2476, 1

</llo_original>
